<compile_context>
chip_gen: v7x
topology: tpu7x:2x2x1
jax: 0.10.0
libtpu: 0.0.40
codegen_flags: <defaults>
</compile_context>

<pallas_src>
import functools

import jax
import jax.numpy as jnp
from jax.experimental import pallas as pl
from jax.experimental.pallas import tpu as pltpu


# ----------------------------------------------------------------------------
# Kernel: one grid step == one column update of (W, Theta).
# ----------------------------------------------------------------------------
def _update_w_kernel(w_in_ref, theta_in_ref,          # initial W / Theta (read once)
                     w1t_ref, b1_ref, w2t_ref, b2_ref, w3t_ref, b3_ref,  # col_learner
                     aparams_ref,                      # alpha_learner scalars (SMEM)
                     w_ref, theta_ref):                # resident outputs (read+write)
    col = pl.program_id(0)
    B, p, _ = w_ref.shape
    f32 = jnp.float32

    # Initialize the resident output buffers from the inputs at the first step.
    @pl.when(col == 0)
    def _():
        w_ref[...] = w_in_ref[...]
        theta_ref[...] = theta_in_ref[...]

    W = w_ref[...]            # (B, p, p)
    Theta = theta_ref[...]    # (B, p, p)

    # One-hot selectors / masks for column `col` (exact zeros, no gathers).
    e_row = (jax.lax.broadcasted_iota(jnp.int32, (1, p), 1) == col).astype(f32)      # (1, p)
    e_last = (jax.lax.broadcasted_iota(jnp.int32, (1, 1, p), 2) == col).astype(f32)  # (1, 1, p)
    e_mid = (jax.lax.broadcasted_iota(jnp.int32, (1, p, 1), 1) == col).astype(f32)   # (1, p, 1)
    m_row = 1.0 - e_row
    m_last = 1.0 - e_last
    m_mid = 1.0 - e_mid

    # ---- gather column `col` of W and Theta via masking -------------------
    w_col = jnp.sum(W * e_last, axis=-1)                         # (B, p)
    w_22 = jnp.sum(w_col * e_row, axis=-1, keepdims=True)        # (B, 1)
    w_12 = w_col * m_row                                         # (B, p), 0 at `col`

    t_col = jnp.sum(Theta * e_last, axis=-1)                     # (B, p)
    theta_22 = jnp.sum(t_col * e_row, axis=-1, keepdims=True)    # (B, 1)
    theta_12 = t_col * m_row                                     # (B, p), 0 at `col`

    # ---- col_learner MLP (weights zero-padded at `col`, pre-transposed) ----
    h = jnp.maximum(
        jnp.dot(w_12, w1t_ref[...], preferred_element_type=f32) + b1_ref[...], 0.0)
    h = jnp.maximum(
        jnp.dot(h, w2t_ref[...], preferred_element_type=f32) + b2_ref[...], 0.0)
    w_12n = (jnp.dot(h, w3t_ref[...], preferred_element_type=f32) + b3_ref[...]) * m_row
    # (B, p), exactly 0 at `col`

    # ---- alpha_learner MLP (1 -> 3 -> 3 -> 1, then exp), unrolled ----------
    ap = aparams_ref  # flat f32[22] in SMEM: a1w(3) a1b(3) a2w(9) a2b(3) a3w(3) a3b(1)
    h1 = [jnp.maximum(w_22 * ap[k] + ap[3 + k], 0.0) for k in range(3)]
    h2 = []
    for j in range(3):
        s = (h1[0] * ap[6 + 3 * j + 0]
             + h1[1] * ap[6 + 3 * j + 1]
             + h1[2] * ap[6 + 3 * j + 2]
             + ap[15 + j])
        h2.append(jnp.maximum(s, 0.0))
    a_out = h2[0] * ap[18] + h2[1] * ap[19] + h2[2] * ap[20] + ap[21]
    alpha = jnp.exp(a_out)                                       # (B, 1)  (the Exp module)

    # ---- Schur-complement pieces -------------------------------------------
    M11 = m_mid * m_last                                          # (1, p, p): zero row/col `col`
    inv_t22 = 1.0 / theta_22                                      # (B, 1)
    outer_tt = theta_12[:, :, None] * theta_12[:, None, :]        # (B, p, p)
    inv_W_11 = Theta * M11 - outer_tt * inv_t22[:, :, None]       # (B, p, p), 0 on row/col `col`

    v = jnp.sum(inv_W_11 * w_12n[:, None, :], axis=-1)            # (B, p) = inv_W_11 @ w_12n
    zeta = jnp.sum(v * w_12n, axis=-1, keepdims=True)             # (B, 1)

    w_22n = alpha + zeta                                          # (B, 1)
    theta_22n = 1.0 / (w_22n - zeta)                              # (B, 1)
    theta_12n = -theta_22n * v                                    # (B, p), 0 at `col`

    # ---- W update: W = W + Delta (row `col`, column `col`, diagonal) -------
    d12 = w_12n - w_12                                            # (B, p), 0 at `col`
    d22 = w_22n - w_22                                            # (B, 1)
    w_ref[...] = (W
                  + d12[:, :, None] * e_last                      # column `col`
                  + d12[:, None, :] * e_mid                       # row `col`
                  + d22[:, :, None] * (e_mid * e_last))           # (col, col)

    # ---- Theta update: full replacement of the four blocks -----------------
    core = inv_W_11 + (theta_12n[:, :, None] * theta_12n[:, None, :]) \
        * (1.0 / theta_22n)[:, :, None]                           # zero on row/col `col`
    theta_ref[...] = (core
                      + theta_12n[:, :, None] * e_last            # column `col`
                      + theta_12n[:, None, :] * e_mid             # row `col`
                      + theta_22n[:, :, None] * (e_mid * e_last)) # (col, col)


# ----------------------------------------------------------------------------
# Wrapper: layout plumbing (per-column zero-padded weights) + pallas_call.
# ----------------------------------------------------------------------------
def update_w_pallas(W, Theta, params):
    (cw1, cb1, cw2, cb2, cw3, cb3, a1w, a1b, a2w, a2b, a3w, a3b) = params
    f32 = jnp.float32
    B, p, _ = W.shape

    cw1, cb1, cw2, cb2, cw3, cb3 = (x.astype(f32) for x in (cw1, cb1, cw2, cb2, cw3, cb3))

    # Expand col_learner first/last layers per column: insert a zero column
    # (input index `col`) / zero row + zero bias (output index `col`) so they
    # act on the mask-embedded p-vectors exactly like on the gathered (p-1)-vectors.
    zcol = jnp.zeros((p, 1), f32)
    zrow = jnp.zeros((1, p), f32)
    w1t_cols, w3t_cols, b3_cols = [], [], []
    for col in range(p):
        w1e = jnp.concatenate([cw1[:, :col], zcol, cw1[:, col:]], axis=1)       # (p, p) [out, in]
        w3e = jnp.concatenate([cw3[:col, :], zrow, cw3[col:, :]], axis=0)       # (p, p) [out, in]
        b3e = jnp.concatenate([cb3[:col], jnp.zeros((1,), f32), cb3[col:]])     # (p,)
        w1t_cols.append(w1e.T)                                                  # (in, out)
        w3t_cols.append(w3e.T)
        b3_cols.append(b3e.reshape(1, p))
    w1t = jnp.stack(w1t_cols)          # (p, p, p)
    w3t = jnp.stack(w3t_cols)          # (p, p, p)
    b3 = jnp.stack(b3_cols)            # (p, 1, p)
    w2t = cw2.T                        # (p, p)
    b1 = cb1.reshape(1, p)
    b2 = cb2.reshape(1, p)

    # Flatten the tiny alpha_learner into one SMEM scalar table (22 floats).
    aparams = jnp.concatenate([a1w.reshape(-1), a1b.reshape(-1),
                               a2w.reshape(-1), a2b.reshape(-1),
                               a3w.reshape(-1), a3b.reshape(-1)]).astype(f32)

    full3 = lambda c: (0, 0, 0)
    full2 = lambda c: (0, 0)
    percol = lambda c: (c, 0, 0)

    W_out, Theta_out = pl.pallas_call(
        _update_w_kernel,
        out_shape=(jax.ShapeDtypeStruct((B, p, p), f32),
                   jax.ShapeDtypeStruct((B, p, p), f32)),
        grid=(p,),
        in_specs=[
            pl.BlockSpec((B, p, p), full3),                          # W (initial)
            pl.BlockSpec((B, p, p), full3),                          # Theta (initial)
            pl.BlockSpec((None, p, p), percol),                      # W1e^T per column
            pl.BlockSpec((1, p), full2),                             # b1
            pl.BlockSpec((p, p), full2),                             # W2^T
            pl.BlockSpec((1, p), full2),                             # b2
            pl.BlockSpec((None, p, p), percol),                      # W3e^T per column
            pl.BlockSpec((None, 1, p), percol),                      # b3e per column
            pl.BlockSpec(memory_space=pltpu.MemorySpace.SMEM),       # alpha params
        ],
        # Constant output block index => W/Theta stay resident in VMEM across
        # all p sequential column updates (accumulator / revisit pattern).
        out_specs=(pl.BlockSpec((B, p, p), full3),
                   pl.BlockSpec((B, p, p), full3)),
        compiler_params=pltpu.CompilerParams(
            dimension_semantics=("arbitrary",)),   # sequential data dependence
    )(W.astype(f32), Theta.astype(f32), w1t, b1, w2t, b2, w3t, b3, aparams)
    return W_out, Theta_out


# ----------------------------------------------------------------------------
# Pure-JAX reference (mirrors the PyTorch forward, f32), for correctness check.
# Note: alpha_learner is applied per batch element on the scalar feature
# w_22[:, None] (the torch code is only shape-consistent for batch == 1; this
# is the natural batched generalization and matches it exactly at batch == 1).
# ----------------------------------------------------------------------------
def update_w_reference(W, Theta, params):
    (cw1, cb1, cw2, cb2, cw3, cb3, a1w, a1b, a2w, a2b, a3w, a3b) = params
    p = W.shape[-1]

    def col_learner(x):
        h = jnp.maximum(x @ cw1.T + cb1, 0.0)
        h = jnp.maximum(h @ cw2.T + cb2, 0.0)
        return h @ cw3.T + cb3

    def alpha_learner(x):
        h = jnp.maximum(x @ a1w.T + a1b, 0.0)
        h = jnp.maximum(h @ a2w.T + a2b, 0.0)
        return jnp.exp(h @ a3w.T + a3b)

    for col in range(p):
        idx = jnp.array([i for i in range(p) if i != col], dtype=jnp.int32)
        w_22 = W[:, col, col]
        w_12 = W[:, idx, col]
        Theta_11 = Theta[:, idx[:, None], idx[None, :]]
        theta_22 = Theta[:, col, col]
        theta_12 = Theta[:, idx, col]

        w_12_next = col_learner(w_12)
        inv_W_11 = Theta_11 - jnp.einsum('b,bi,bj->bij', 1.0 / theta_22, theta_12, theta_12)
        zeta = jnp.einsum('bi,bij,bj->b', w_12_next, inv_W_11, w_12_next)
        w_22_next = alpha_learner(w_22[:, None])[:, 0] + zeta

        W = W.at[:, idx, col].set(w_12_next)
        W = W.at[:, col, idx].set(w_12_next)
        W = W.at[:, col, col].set(w_22_next)

        theta_22_next = 1.0 / (w_22_next - zeta)
        theta_12_next = jnp.einsum('b,bij,bj->bi', -theta_22_next, inv_W_11, w_12_next)
        Theta = Theta.at[:, idx[:, None], idx[None, :]].set(
            inv_W_11 + jnp.einsum('b,bi,bj->bij', 1.0 / theta_22_next,
                                  theta_12_next, theta_12_next))
        Theta = Theta.at[:, idx, col].set(theta_12_next)
        Theta = Theta.at[:, col, idx].set(theta_12_next)
        Theta = Theta.at[:, col, col].set(theta_22_next)
    return W, Theta


if __name__ == "__main__":
    jax.config.update("jax_default_matmul_precision", "highest")
    f32 = jnp.float32
    p, B = 8, 2

    key = jax.random.PRNGKey(0)
    keys = jax.random.split(key, 14)

    # Learned weights (deterministic random init, f32).
    cw1 = 0.3 * jax.random.normal(keys[0], (p, p - 1), f32)
    cb1 = 0.1 * jax.random.normal(keys[1], (p,), f32)
    cw2 = 0.3 * jax.random.normal(keys[2], (p, p), f32)
    cb2 = 0.1 * jax.random.normal(keys[3], (p,), f32)
    cw3 = 0.3 * jax.random.normal(keys[4], (p - 1, p), f32)
    cb3 = 0.1 * jax.random.normal(keys[5], (p - 1,), f32)
    a1w = 0.5 * jax.random.normal(keys[6], (3, 1), f32)
    a1b = 0.1 * jax.random.normal(keys[7], (3,), f32)
    a2w = 0.5 * jax.random.normal(keys[8], (3, 3), f32)
    a2b = 0.1 * jax.random.normal(keys[9], (3,), f32)
    a3w = 0.3 * jax.random.normal(keys[10], (1, 3), f32)
    a3b = 0.1 * jax.random.normal(keys[11], (1,), f32)
    params = (cw1, cb1, cw2, cb2, cw3, cb3, a1w, a1b, a2w, a2b, a3w, a3b)

    # SPD W and Theta = W^{-1} (the natural operating point of the module).
    A = jax.random.normal(keys[12], (B, p, p), f32)
    W0 = jnp.eye(p, dtype=f32)[None] + 0.1 * jnp.einsum('bij,bkj->bik', A, A) / p
    Theta0 = jnp.linalg.inv(W0)

    W_out, Theta_out = update_w_pallas(W0, Theta0, params)
    W_out = jax.block_until_ready(W_out)
    Theta_out = jax.block_until_ready(Theta_out)

    W_ref, Theta_ref = update_w_reference(W0, Theta0, params)

    assert W_out.shape == (B, p, p) and Theta_out.shape == (B, p, p)
    assert jnp.allclose(W_out, W_ref, rtol=5e-3, atol=5e-3), "W mismatch vs reference"
    assert jnp.allclose(Theta_out, Theta_ref, rtol=5e-3, atol=5e-3), "Theta mismatch vs reference"

    print("KERNEL_OK")
</pallas_src>

<mosaic_0001>
module attributes {stable_mosaic.version = 11 : i64} {
  func.func @_update_w_kernel(%arg0: i32, %arg1: memref<2x8x8xf32, #tpu.memory_space<vmem>>, %arg2: memref<2x8x8xf32, #tpu.memory_space<vmem>>, %arg3: memref<1x8x8xf32, #tpu.memory_space<vmem>>, %arg4: memref<1x8xf32, #tpu.memory_space<vmem>>, %arg5: memref<8x8xf32, #tpu.memory_space<vmem>>, %arg6: memref<1x8xf32, #tpu.memory_space<vmem>>, %arg7: memref<1x8x8xf32, #tpu.memory_space<vmem>>, %arg8: memref<1x1x8xf32, #tpu.memory_space<vmem>>, %arg9: memref<22xf32, #tpu.memory_space<smem>>, %arg10: memref<2x8x8xf32, #tpu.memory_space<vmem>>, %arg11: memref<2x8x8xf32, #tpu.memory_space<vmem>>) attributes {dimension_semantics = [#tpu.dimension_semantics<arbitrary>], iteration_bounds = array<i64: 8>, scalar_prefetch = 0 : i64, scratch_operands = 0 : i64, tpu.core_type = #tpu.core_type<tc>, window_params = [{pipeline_mode = #tpu.pipeline_mode<synchronous>, transform_indices = @transform_0, window_bounds = array<i64: 2, 8, 8>}, {pipeline_mode = #tpu.pipeline_mode<synchronous>, transform_indices = @transform_1, window_bounds = array<i64: 2, 8, 8>}, {transform_indices = @transform_2, window_bounds = array<i64: 1, 8, 8>}, {pipeline_mode = #tpu.pipeline_mode<synchronous>, transform_indices = @transform_3, window_bounds = array<i64: 1, 8>}, {pipeline_mode = #tpu.pipeline_mode<synchronous>, transform_indices = @transform_4, window_bounds = array<i64: 8, 8>}, {pipeline_mode = #tpu.pipeline_mode<synchronous>, transform_indices = @transform_5, window_bounds = array<i64: 1, 8>}, {transform_indices = @transform_6, window_bounds = array<i64: 1, 8, 8>}, {transform_indices = @transform_7, window_bounds = array<i64: 1, 1, 8>}, {transform_indices = @transform_8, window_bounds = array<i64: 22>}, {pipeline_mode = #tpu.pipeline_mode<synchronous>, transform_indices = @transform_9, window_bounds = array<i64: 2, 8, 8>}, {pipeline_mode = #tpu.pipeline_mode<synchronous>, transform_indices = @transform_10, window_bounds = array<i64: 2, 8, 8>}]} {
    %c0_i32 = arith.constant 0 : i32
    %0 = arith.cmpi eq, %arg0, %c0_i32 : i32
    %1 = arith.extui %0 : i1 to i32
    %c0_i32_0 = arith.constant 0 : i32
    %2 = arith.cmpi ne, %1, %c0_i32_0 : i32
    scf.if %2 {
      %c0_51 = arith.constant 0 : index
      %c0_52 = arith.constant 0 : index
      %c0_53 = arith.constant 0 : index
      %237 = vector.load %arg1[%c0_51, %c0_52, %c0_53] : memref<2x8x8xf32, #tpu.memory_space<vmem>>, vector<2x8x8xf32>
      %c0_54 = arith.constant 0 : index
      %c0_55 = arith.constant 0 : index
      %c0_56 = arith.constant 0 : index
      %238 = vector.load %arg10[%c0_54, %c0_55, %c0_56] : memref<2x8x8xf32, #tpu.memory_space<vmem>>, vector<2x8x8xf32>
      tpu.vector_store %arg10[%c0_54, %c0_55, %c0_56], %237 {strides = array<i32>} : memref<2x8x8xf32, #tpu.memory_space<vmem>>, vector<2x8x8xf32>,
      %c0_57 = arith.constant 0 : index
      %c0_58 = arith.constant 0 : index
      %c0_59 = arith.constant 0 : index
      %239 = vector.load %arg2[%c0_57, %c0_58, %c0_59] : memref<2x8x8xf32, #tpu.memory_space<vmem>>, vector<2x8x8xf32>
      %c0_60 = arith.constant 0 : index
      %c0_61 = arith.constant 0 : index
      %c0_62 = arith.constant 0 : index
      %240 = vector.load %arg11[%c0_60, %c0_61, %c0_62] : memref<2x8x8xf32, #tpu.memory_space<vmem>>, vector<2x8x8xf32>
      tpu.vector_store %arg11[%c0_60, %c0_61, %c0_62], %239 {strides = array<i32>} : memref<2x8x8xf32, #tpu.memory_space<vmem>>, vector<2x8x8xf32>,
    } else {
    }
    %c0 = arith.constant 0 : index
    %c0_1 = arith.constant 0 : index
    %c0_2 = arith.constant 0 : index
    %3 = vector.load %arg10[%c0, %c0_1, %c0_2] : memref<2x8x8xf32, #tpu.memory_space<vmem>>, vector<2x8x8xf32>
    %c0_3 = arith.constant 0 : index
    %c0_4 = arith.constant 0 : index
    %c0_5 = arith.constant 0 : index
    %4 = vector.load %arg11[%c0_3, %c0_4, %c0_5] : memref<2x8x8xf32, #tpu.memory_space<vmem>>, vector<2x8x8xf32>
    %5 = tpu.iota {dimensions = array<i32: 1>} : vector<1x8xi32>
    %6 = vector.broadcast %arg0 : i32 to vector<1x8xi32>
    %7 = arith.cmpi eq, %5, %6 : vector<1x8xi32>
    %8 = arith.extui %7 : vector<1x8xi1> to vector<1x8xi32>
    %9 = arith.sitofp %8 : vector<1x8xi32> to vector<1x8xf32>
    %10 = tpu.iota {dimensions = array<i32: 2>} : vector<1x1x8xi32>
    %11 = vector.broadcast %arg0 : i32 to vector<1x1x8xi32>
    %12 = arith.cmpi eq, %10, %11 : vector<1x1x8xi32>
    %13 = arith.extui %12 : vector<1x1x8xi1> to vector<1x1x8xi32>
    %14 = arith.sitofp %13 : vector<1x1x8xi32> to vector<1x1x8xf32>
    %15 = tpu.iota {dimensions = array<i32: 1>} : vector<1x8x1xi32>
    %16 = vector.broadcast %arg0 : i32 to vector<1x8x1xi32>
    %17 = arith.cmpi eq, %15, %16 : vector<1x8x1xi32>
    %18 = arith.extui %17 : vector<1x8x1xi1> to vector<1x8x1xi32>
    %19 = arith.sitofp %18 : vector<1x8x1xi32> to vector<1x8x1xf32>
    %cst = arith.constant 1.000000e+00 : f32
    %20 = vector.broadcast %cst : f32 to vector<1x8xf32>
    %21 = arith.subf %20, %9 : vector<1x8xf32>
    %cst_6 = arith.constant 1.000000e+00 : f32
    %22 = vector.broadcast %cst_6 : f32 to vector<1x1x8xf32>
    %23 = arith.subf %22, %14 : vector<1x1x8xf32>
    %cst_7 = arith.constant 1.000000e+00 : f32
    %24 = vector.broadcast %cst_7 : f32 to vector<1x8x1xf32>
    %25 = arith.subf %24, %19 : vector<1x8x1xf32>
    %26 = vector.broadcast %14 : vector<1x1x8xf32> to vector<2x8x8xf32>
    %27 = arith.mulf %3, %26 : vector<2x8x8xf32>
    %cst_8 = arith.constant dense<0.000000e+00> : vector<2x8xf32>
    %28 = vector.multi_reduction <add>, %27, %cst_8 [2] : vector<2x8x8xf32> to vector<2x8xf32>
    %29 = vector.broadcast %9 : vector<1x8xf32> to vector<2x8xf32>
    %30 = arith.mulf %28, %29 : vector<2x8xf32>
    %cst_9 = arith.constant dense<0.000000e+00> : vector<2xf32>
    %31 = vector.multi_reduction <add>, %30, %cst_9 [1] : vector<2x8xf32> to vector<2xf32>
    %32 = vector.shape_cast %31 : vector<2xf32> to vector<2x1xf32>
    %33 = vector.broadcast %21 : vector<1x8xf32> to vector<2x8xf32>
    %34 = arith.mulf %28, %33 : vector<2x8xf32>
    %35 = vector.broadcast %14 : vector<1x1x8xf32> to vector<2x8x8xf32>
    %36 = arith.mulf %4, %35 : vector<2x8x8xf32>
    %cst_10 = arith.constant dense<0.000000e+00> : vector<2x8xf32>
    %37 = vector.multi_reduction <add>, %36, %cst_10 [2] : vector<2x8x8xf32> to vector<2x8xf32>
    %38 = vector.broadcast %9 : vector<1x8xf32> to vector<2x8xf32>
    %39 = arith.mulf %37, %38 : vector<2x8xf32>
    %cst_11 = arith.constant dense<0.000000e+00> : vector<2xf32>
    %40 = vector.multi_reduction <add>, %39, %cst_11 [1] : vector<2x8xf32> to vector<2xf32>
    %41 = vector.shape_cast %40 : vector<2xf32> to vector<2x1xf32>
    %42 = vector.broadcast %21 : vector<1x8xf32> to vector<2x8xf32>
    %43 = arith.mulf %37, %42 : vector<2x8xf32>
    %c0_12 = arith.constant 0 : index
    %c0_13 = arith.constant 0 : index
    %c0_14 = arith.constant 0 : index
    %44 = vector.load %arg3[%c0_12, %c0_13, %c0_14] : memref<1x8x8xf32, #tpu.memory_space<vmem>>, vector<1x8x8xf32>
    %45 = vector.shape_cast %44 : vector<1x8x8xf32> to vector<8x8xf32>
    %cst_15 = arith.constant dense<0.000000e+00> : vector<2x8xf32>
    %46 = tpu.matmul %34, %45, %cst_15 {dimension_numbers = #tpu.dot_dimension_numbers<[1], [0], [0], [1], [0, 0, 1, 1], [], []>, precision = #tpu.contract_precision<fp32>} : vector<2x8xf32>, vector<8x8xf32>, vector<2x8xf32> -> vector<2x8xf32>
    %c0_16 = arith.constant 0 : index
    %c0_17 = arith.constant 0 : index
    %47 = vector.load %arg4[%c0_16, %c0_17] : memref<1x8xf32, #tpu.memory_space<vmem>>, vector<1x8xf32>
    %48 = vector.broadcast %47 : vector<1x8xf32> to vector<2x8xf32>
    %49 = arith.addf %46, %48 : vector<2x8xf32>
    %cst_18 = arith.constant 0.000000e+00 : f32
    %50 = vector.broadcast %cst_18 : f32 to vector<2x8xf32>
    %51 = arith.maximumf %49, %50 : vector<2x8xf32>
    %c0_19 = arith.constant 0 : index
    %c0_20 = arith.constant 0 : index
    %52 = vector.load %arg5[%c0_19, %c0_20] : memref<8x8xf32, #tpu.memory_space<vmem>>, vector<8x8xf32>
    %cst_21 = arith.constant dense<0.000000e+00> : vector<2x8xf32>
    %53 = tpu.matmul %51, %52, %cst_21 {dimension_numbers = #tpu.dot_dimension_numbers<[1], [0], [0], [1], [0, 0, 1, 1], [], []>, precision = #tpu.contract_precision<fp32>} : vector<2x8xf32>, vector<8x8xf32>, vector<2x8xf32> -> vector<2x8xf32>
    %c0_22 = arith.constant 0 : index
    %c0_23 = arith.constant 0 : index
    %54 = vector.load %arg6[%c0_22, %c0_23] : memref<1x8xf32, #tpu.memory_space<vmem>>, vector<1x8xf32>
    %55 = vector.broadcast %54 : vector<1x8xf32> to vector<2x8xf32>
    %56 = arith.addf %53, %55 : vector<2x8xf32>
    %cst_24 = arith.constant 0.000000e+00 : f32
    %57 = vector.broadcast %cst_24 : f32 to vector<2x8xf32>
    %58 = arith.maximumf %56, %57 : vector<2x8xf32>
    %c0_25 = arith.constant 0 : index
    %c0_26 = arith.constant 0 : index
    %c0_27 = arith.constant 0 : index
    %59 = vector.load %arg7[%c0_25, %c0_26, %c0_27] : memref<1x8x8xf32, #tpu.memory_space<vmem>>, vector<1x8x8xf32>
    %60 = vector.shape_cast %59 : vector<1x8x8xf32> to vector<8x8xf32>
    %cst_28 = arith.constant dense<0.000000e+00> : vector<2x8xf32>
    %61 = tpu.matmul %58, %60, %cst_28 {dimension_numbers = #tpu.dot_dimension_numbers<[1], [0], [0], [1], [0, 0, 1, 1], [], []>, precision = #tpu.contract_precision<fp32>} : vector<2x8xf32>, vector<8x8xf32>, vector<2x8xf32> -> vector<2x8xf32>
    %c0_29 = arith.constant 0 : index
    %c0_30 = arith.constant 0 : index
    %c0_31 = arith.constant 0 : index
    %62 = vector.load %arg8[%c0_29, %c0_30, %c0_31] : memref<1x1x8xf32, #tpu.memory_space<vmem>>, vector<1x1x8xf32>
    %63 = vector.shape_cast %62 : vector<1x1x8xf32> to vector<1x8xf32>
    %64 = vector.broadcast %63 : vector<1x8xf32> to vector<2x8xf32>
    %65 = arith.addf %61, %64 : vector<2x8xf32>
    %66 = vector.broadcast %21 : vector<1x8xf32> to vector<2x8xf32>
    %67 = arith.mulf %65, %66 : vector<2x8xf32>
    %c0_32 = arith.constant 0 : index
    %68 = memref.load %arg9[%c0_32] : memref<22xf32, #tpu.memory_space<smem>>
    %69 = vector.broadcast %68 : f32 to vector<2x1xf32>
    %70 = arith.mulf %32, %69 : vector<2x1xf32>
    %c3 = arith.constant 3 : index
    %71 = memref.load %arg9[%c3] : memref<22xf32, #tpu.memory_space<smem>>
    %72 = vector.broadcast %71 : f32 to vector<2x1xf32>
    %73 = arith.addf %70, %72 : vector<2x1xf32>
    %cst_33 = arith.constant 0.000000e+00 : f32
    %74 = vector.broadcast %cst_33 : f32 to vector<2x1xf32>
    %75 = arith.maximumf %73, %74 : vector<2x1xf32>
    %c1 = arith.constant 1 : index
    %76 = memref.load %arg9[%c1] : memref<22xf32, #tpu.memory_space<smem>>
    %77 = vector.broadcast %76 : f32 to vector<2x1xf32>
    %78 = arith.mulf %32, %77 : vector<2x1xf32>
    %c4 = arith.constant 4 : index
    %79 = memref.load %arg9[%c4] : memref<22xf32, #tpu.memory_space<smem>>
    %80 = vector.broadcast %79 : f32 to vector<2x1xf32>
    %81 = arith.addf %78, %80 : vector<2x1xf32>
    %cst_34 = arith.constant 0.000000e+00 : f32
    %82 = vector.broadcast %cst_34 : f32 to vector<2x1xf32>
    %83 = arith.maximumf %81, %82 : vector<2x1xf32>
    %c2 = arith.constant 2 : index
    %84 = memref.load %arg9[%c2] : memref<22xf32, #tpu.memory_space<smem>>
    %85 = vector.broadcast %84 : f32 to vector<2x1xf32>
    %86 = arith.mulf %32, %85 : vector<2x1xf32>
    %c5 = arith.constant 5 : index
    %87 = memref.load %arg9[%c5] : memref<22xf32, #tpu.memory_space<smem>>
    %88 = vector.broadcast %87 : f32 to vector<2x1xf32>
    %89 = arith.addf %86, %88 : vector<2x1xf32>
    %cst_35 = arith.constant 0.000000e+00 : f32
    %90 = vector.broadcast %cst_35 : f32 to vector<2x1xf32>
    %91 = arith.maximumf %89, %90 : vector<2x1xf32>
    %c6 = arith.constant 6 : index
    %92 = memref.load %arg9[%c6] : memref<22xf32, #tpu.memory_space<smem>>
    %93 = vector.broadcast %92 : f32 to vector<2x1xf32>
    %94 = arith.mulf %75, %93 : vector<2x1xf32>
    %c7 = arith.constant 7 : index
    %95 = memref.load %arg9[%c7] : memref<22xf32, #tpu.memory_space<smem>>
    %96 = vector.broadcast %95 : f32 to vector<2x1xf32>
    %97 = arith.mulf %83, %96 : vector<2x1xf32>
    %98 = arith.addf %94, %97 : vector<2x1xf32>
    %c8 = arith.constant 8 : index
    %99 = memref.load %arg9[%c8] : memref<22xf32, #tpu.memory_space<smem>>
    %100 = vector.broadcast %99 : f32 to vector<2x1xf32>
    %101 = arith.mulf %91, %100 : vector<2x1xf32>
    %102 = arith.addf %98, %101 : vector<2x1xf32>
    %c15 = arith.constant 15 : index
    %103 = memref.load %arg9[%c15] : memref<22xf32, #tpu.memory_space<smem>>
    %104 = vector.broadcast %103 : f32 to vector<2x1xf32>
    %105 = arith.addf %102, %104 : vector<2x1xf32>
    %cst_36 = arith.constant 0.000000e+00 : f32
    %106 = vector.broadcast %cst_36 : f32 to vector<2x1xf32>
    %107 = arith.maximumf %105, %106 : vector<2x1xf32>
    %c9 = arith.constant 9 : index
    %108 = memref.load %arg9[%c9] : memref<22xf32, #tpu.memory_space<smem>>
    %109 = vector.broadcast %108 : f32 to vector<2x1xf32>
    %110 = arith.mulf %75, %109 : vector<2x1xf32>
    %c10 = arith.constant 10 : index
    %111 = memref.load %arg9[%c10] : memref<22xf32, #tpu.memory_space<smem>>
    %112 = vector.broadcast %111 : f32 to vector<2x1xf32>
    %113 = arith.mulf %83, %112 : vector<2x1xf32>
    %114 = arith.addf %110, %113 : vector<2x1xf32>
    %c11 = arith.constant 11 : index
    %115 = memref.load %arg9[%c11] : memref<22xf32, #tpu.memory_space<smem>>
    %116 = vector.broadcast %115 : f32 to vector<2x1xf32>
    %117 = arith.mulf %91, %116 : vector<2x1xf32>
    %118 = arith.addf %114, %117 : vector<2x1xf32>
    %c16 = arith.constant 16 : index
    %119 = memref.load %arg9[%c16] : memref<22xf32, #tpu.memory_space<smem>>
    %120 = vector.broadcast %119 : f32 to vector<2x1xf32>
    %121 = arith.addf %118, %120 : vector<2x1xf32>
    %cst_37 = arith.constant 0.000000e+00 : f32
    %122 = vector.broadcast %cst_37 : f32 to vector<2x1xf32>
    %123 = arith.maximumf %121, %122 : vector<2x1xf32>
    %c12 = arith.constant 12 : index
    %124 = memref.load %arg9[%c12] : memref<22xf32, #tpu.memory_space<smem>>
    %125 = vector.broadcast %124 : f32 to vector<2x1xf32>
    %126 = arith.mulf %75, %125 : vector<2x1xf32>
    %c13 = arith.constant 13 : index
    %127 = memref.load %arg9[%c13] : memref<22xf32, #tpu.memory_space<smem>>
    %128 = vector.broadcast %127 : f32 to vector<2x1xf32>
    %129 = arith.mulf %83, %128 : vector<2x1xf32>
    %130 = arith.addf %126, %129 : vector<2x1xf32>
    %c14 = arith.constant 14 : index
    %131 = memref.load %arg9[%c14] : memref<22xf32, #tpu.memory_space<smem>>
    %132 = vector.broadcast %131 : f32 to vector<2x1xf32>
    %133 = arith.mulf %91, %132 : vector<2x1xf32>
    %134 = arith.addf %130, %133 : vector<2x1xf32>
    %c17 = arith.constant 17 : index
    %135 = memref.load %arg9[%c17] : memref<22xf32, #tpu.memory_space<smem>>
    %136 = vector.broadcast %135 : f32 to vector<2x1xf32>
    %137 = arith.addf %134, %136 : vector<2x1xf32>
    %cst_38 = arith.constant 0.000000e+00 : f32
    %138 = vector.broadcast %cst_38 : f32 to vector<2x1xf32>
    %139 = arith.maximumf %137, %138 : vector<2x1xf32>
    %c18 = arith.constant 18 : index
    %140 = memref.load %arg9[%c18] : memref<22xf32, #tpu.memory_space<smem>>
    %141 = vector.broadcast %140 : f32 to vector<2x1xf32>
    %142 = arith.mulf %107, %141 : vector<2x1xf32>
    %c19 = arith.constant 19 : index
    %143 = memref.load %arg9[%c19] : memref<22xf32, #tpu.memory_space<smem>>
    %144 = vector.broadcast %143 : f32 to vector<2x1xf32>
    %145 = arith.mulf %123, %144 : vector<2x1xf32>
    %146 = arith.addf %142, %145 : vector<2x1xf32>
    %c20 = arith.constant 20 : index
    %147 = memref.load %arg9[%c20] : memref<22xf32, #tpu.memory_space<smem>>
    %148 = vector.broadcast %147 : f32 to vector<2x1xf32>
    %149 = arith.mulf %139, %148 : vector<2x1xf32>
    %150 = arith.addf %146, %149 : vector<2x1xf32>
    %c21 = arith.constant 21 : index
    %151 = memref.load %arg9[%c21] : memref<22xf32, #tpu.memory_space<smem>>
    %152 = vector.broadcast %151 : f32 to vector<2x1xf32>
    %153 = arith.addf %150, %152 : vector<2x1xf32>
    %154 = math.exp %153 : vector<2x1xf32>
    %155 = vector.broadcast %25 : vector<1x8x1xf32> to vector<1x8x8xf32>
    %156 = vector.broadcast %23 : vector<1x1x8xf32> to vector<1x8x8xf32>
    %157 = arith.mulf %155, %156 : vector<1x8x8xf32>
    %cst_39 = arith.constant 1.000000e+00 : f32
    %158 = vector.broadcast %cst_39 : f32 to vector<2x1xf32>
    %159 = arith.divf %158, %41 : vector<2x1xf32>
    %160 = vector.shape_cast %43 : vector<2x8xf32> to vector<2x8x1xf32>
    %161 = vector.shape_cast %43 : vector<2x8xf32> to vector<2x1x8xf32>
    %162 = vector.broadcast %160 : vector<2x8x1xf32> to vector<2x8x8xf32>
    %163 = vector.broadcast %161 : vector<2x1x8xf32> to vector<2x8x8xf32>
    %164 = arith.mulf %162, %163 : vector<2x8x8xf32>
    %165 = vector.broadcast %157 : vector<1x8x8xf32> to vector<2x8x8xf32>
    %166 = arith.mulf %4, %165 : vector<2x8x8xf32>
    %167 = vector.shape_cast %159 : vector<2x1xf32> to vector<2x1x1xf32>
    %168 = vector.broadcast %167 : vector<2x1x1xf32> to vector<2x8x8xf32>
    %169 = arith.mulf %164, %168 : vector<2x8x8xf32>
    %170 = arith.subf %166, %169 : vector<2x8x8xf32>
    %171 = vector.shape_cast %67 : vector<2x8xf32> to vector<2x1x8xf32>
    %172 = vector.broadcast %171 : vector<2x1x8xf32> to vector<2x8x8xf32>
    %173 = arith.mulf %170, %172 : vector<2x8x8xf32>
    %cst_40 = arith.constant dense<0.000000e+00> : vector<2x8xf32>
    %174 = vector.multi_reduction <add>, %173, %cst_40 [2] : vector<2x8x8xf32> to vector<2x8xf32>
    %175 = arith.mulf %174, %67 : vector<2x8xf32>
    %cst_41 = arith.constant dense<0.000000e+00> : vector<2xf32>
    %176 = vector.multi_reduction <add>, %175, %cst_41 [1] : vector<2x8xf32> to vector<2xf32>
    %177 = vector.shape_cast %176 : vector<2xf32> to vector<2x1xf32>
    %178 = arith.addf %154, %177 : vector<2x1xf32>
    %179 = arith.subf %178, %177 : vector<2x1xf32>
    %cst_42 = arith.constant 1.000000e+00 : f32
    %180 = vector.broadcast %cst_42 : f32 to vector<2x1xf32>
    %181 = arith.divf %180, %179 : vector<2x1xf32>
    %cst_43 = arith.constant 0.000000e+00 : f32
    %182 = vector.broadcast %cst_43 : f32 to vector<2x1xf32>
    %183 = arith.subf %182, %181 : vector<2x1xf32>
    %184 = vector.broadcast %183 : vector<2x1xf32> to vector<2x8xf32>
    %185 = arith.mulf %184, %174 : vector<2x8xf32>
    %186 = arith.subf %67, %34 : vector<2x8xf32>
    %187 = arith.subf %178, %32 : vector<2x1xf32>
    %188 = vector.shape_cast %186 : vector<2x8xf32> to vector<2x8x1xf32>
    %189 = vector.broadcast %188 : vector<2x8x1xf32> to vector<2x8x8xf32>
    %190 = vector.broadcast %14 : vector<1x1x8xf32> to vector<2x8x8xf32>
    %191 = arith.mulf %189, %190 : vector<2x8x8xf32>
    %192 = arith.addf %3, %191 : vector<2x8x8xf32>
    %193 = vector.shape_cast %186 : vector<2x8xf32> to vector<2x1x8xf32>
    %194 = vector.broadcast %193 : vector<2x1x8xf32> to vector<2x8x8xf32>
    %195 = vector.broadcast %19 : vector<1x8x1xf32> to vector<2x8x8xf32>
    %196 = arith.mulf %194, %195 : vector<2x8x8xf32>
    %197 = arith.addf %192, %196 : vector<2x8x8xf32>
    %198 = vector.shape_cast %187 : vector<2x1xf32> to vector<2x1x1xf32>
    %199 = vector.broadcast %19 : vector<1x8x1xf32> to vector<1x8x8xf32>
    %200 = vector.broadcast %14 : vector<1x1x8xf32> to vector<1x8x8xf32>
    %201 = arith.mulf %199, %200 : vector<1x8x8xf32>
    %202 = vector.broadcast %198 : vector<2x1x1xf32> to vector<2x8x8xf32>
    %203 = vector.broadcast %201 : vector<1x8x8xf32> to vector<2x8x8xf32>
    %204 = arith.mulf %202, %203 : vector<2x8x8xf32>
    %205 = arith.addf %197, %204 : vector<2x8x8xf32>
    %c0_44 = arith.constant 0 : index
    %c0_45 = arith.constant 0 : index
    %c0_46 = arith.constant 0 : index
    %206 = vector.load %arg10[%c0_44, %c0_45, %c0_46] : memref<2x8x8xf32, #tpu.memory_space<vmem>>, vector<2x8x8xf32>
    tpu.vector_store %arg10[%c0_44, %c0_45, %c0_46], %205 {strides = array<i32>} : memref<2x8x8xf32, #tpu.memory_space<vmem>>, vector<2x8x8xf32>,
    %207 = vector.shape_cast %185 : vector<2x8xf32> to vector<2x8x1xf32>
    %208 = vector.shape_cast %185 : vector<2x8xf32> to vector<2x1x8xf32>
    %209 = vector.broadcast %207 : vector<2x8x1xf32> to vector<2x8x8xf32>
    %210 = vector.broadcast %208 : vector<2x1x8xf32> to vector<2x8x8xf32>
    %211 = arith.mulf %209, %210 : vector<2x8x8xf32>
    %cst_47 = arith.constant 1.000000e+00 : f32
    %212 = vector.broadcast %cst_47 : f32 to vector<2x1xf32>
    %213 = arith.divf %212, %181 : vector<2x1xf32>
    %214 = vector.shape_cast %213 : vector<2x1xf32> to vector<2x1x1xf32>
    %215 = vector.broadcast %214 : vector<2x1x1xf32> to vector<2x8x8xf32>
    %216 = arith.mulf %211, %215 : vector<2x8x8xf32>
    %217 = arith.addf %170, %216 : vector<2x8x8xf32>
    %218 = vector.shape_cast %185 : vector<2x8xf32> to vector<2x8x1xf32>
    %219 = vector.broadcast %218 : vector<2x8x1xf32> to vector<2x8x8xf32>
    %220 = vector.broadcast %14 : vector<1x1x8xf32> to vector<2x8x8xf32>
    %221 = arith.mulf %219, %220 : vector<2x8x8xf32>
    %222 = arith.addf %217, %221 : vector<2x8x8xf32>
    %223 = vector.shape_cast %185 : vector<2x8xf32> to vector<2x1x8xf32>
    %224 = vector.broadcast %223 : vector<2x1x8xf32> to vector<2x8x8xf32>
    %225 = vector.broadcast %19 : vector<1x8x1xf32> to vector<2x8x8xf32>
    %226 = arith.mulf %224, %225 : vector<2x8x8xf32>
    %227 = arith.addf %222, %226 : vector<2x8x8xf32>
    %228 = vector.shape_cast %181 : vector<2x1xf32> to vector<2x1x1xf32>
    %229 = vector.broadcast %19 : vector<1x8x1xf32> to vector<1x8x8xf32>
    %230 = vector.broadcast %14 : vector<1x1x8xf32> to vector<1x8x8xf32>
    %231 = arith.mulf %229, %230 : vector<1x8x8xf32>
    %232 = vector.broadcast %228 : vector<2x1x1xf32> to vector<2x8x8xf32>
    %233 = vector.broadcast %231 : vector<1x8x8xf32> to vector<2x8x8xf32>
    %234 = arith.mulf %232, %233 : vector<2x8x8xf32>
    %235 = arith.addf %227, %234 : vector<2x8x8xf32>
    %c0_48 = arith.constant 0 : index
    %c0_49 = arith.constant 0 : index
    %c0_50 = arith.constant 0 : index
    %236 = vector.load %arg11[%c0_48, %c0_49, %c0_50] : memref<2x8x8xf32, #tpu.memory_space<vmem>>, vector<2x8x8xf32>
    tpu.vector_store %arg11[%c0_48, %c0_49, %c0_50], %235 {strides = array<i32>} : memref<2x8x8xf32, #tpu.memory_space<vmem>>, vector<2x8x8xf32>,
    return
  }
  func.func @transform_0(%arg0: i32) -> (i32, i32, i32) {
    %c0_i32 = arith.constant 0 : i32
    %c0_i32_0 = arith.constant 0 : i32
    %c0_i32_1 = arith.constant 0 : i32
    %c0_i32_2 = arith.constant 0 : i32
    return %c0_i32, %c0_i32_0, %c0_i32_1 : i32, i32, i32
  }
  func.func @transform_1(%arg0: i32) -> (i32, i32, i32) {
    %c0_i32 = arith.constant 0 : i32
    %c0_i32_0 = arith.constant 0 : i32
    %c0_i32_1 = arith.constant 0 : i32
    %c0_i32_2 = arith.constant 0 : i32
    return %c0_i32, %c0_i32_0, %c0_i32_1 : i32, i32, i32
  }
  func.func @transform_2(%arg0: i32) -> (i32, i32, i32) {
    %c0_i32 = arith.constant 0 : i32
    %c0_i32_0 = arith.constant 0 : i32
    %c0_i32_1 = arith.constant 0 : i32
    return %arg0, %c0_i32, %c0_i32_0 : i32, i32, i32
  }
  func.func @transform_3(%arg0: i32) -> (i32, i32) {
    %c0_i32 = arith.constant 0 : i32
    %c0_i32_0 = arith.constant 0 : i32
    %c0_i32_1 = arith.constant 0 : i32
    return %c0_i32, %c0_i32_0 : i32, i32
  }
  func.func @transform_4(%arg0: i32) -> (i32, i32) {
    %c0_i32 = arith.constant 0 : i32
    %c0_i32_0 = arith.constant 0 : i32
    %c0_i32_1 = arith.constant 0 : i32
    return %c0_i32, %c0_i32_0 : i32, i32
  }
  func.func @transform_5(%arg0: i32) -> (i32, i32) {
    %c0_i32 = arith.constant 0 : i32
    %c0_i32_0 = arith.constant 0 : i32
    %c0_i32_1 = arith.constant 0 : i32
    return %c0_i32, %c0_i32_0 : i32, i32
  }
  func.func @transform_6(%arg0: i32) -> (i32, i32, i32) {
    %c0_i32 = arith.constant 0 : i32
    %c0_i32_0 = arith.constant 0 : i32
    %c0_i32_1 = arith.constant 0 : i32
    return %arg0, %c0_i32, %c0_i32_0 : i32, i32, i32
  }
  func.func @transform_7(%arg0: i32) -> (i32, i32, i32) {
    %c0_i32 = arith.constant 0 : i32
    %c0_i32_0 = arith.constant 0 : i32
    %c0_i32_1 = arith.constant 0 : i32
    return %arg0, %c0_i32, %c0_i32_0 : i32, i32, i32
  }
  func.func @transform_8(%arg0: i32) -> i32 {
    %c0_i32 = arith.constant 0 : i32
    %c0_i32_0 = arith.constant 0 : i32
    return %c0_i32 : i32
  }
  func.func @transform_9(%arg0: i32) -> (i32, i32, i32) {
    %c0_i32 = arith.constant 0 : i32
    %c0_i32_0 = arith.constant 0 : i32
    %c0_i32_1 = arith.constant 0 : i32
    %c0_i32_2 = arith.constant 0 : i32
    return %c0_i32, %c0_i32_0, %c0_i32_1 : i32, i32, i32
  }
  func.func @transform_10(%arg0: i32) -> (i32, i32, i32) {
    %c0_i32 = arith.constant 0 : i32
    %c0_i32_0 = arith.constant 0 : i32
    %c0_i32_1 = arith.constant 0 : i32
    %c0_i32_2 = arith.constant 0 : i32
    return %c0_i32, %c0_i32_0, %c0_i32_1 : i32, i32, i32
  }
}

</mosaic_0001>

<llo_original>
// kernel: tpu_custom_call.1
$region0: #{tpu_custom_call.1}
  #allocation0 [shape = 'u32[]', space=smem, size = 0x4, offset = 0x4, fixed_abs, tag = 'smem constant byte address 0x4 - core index']
  #allocation1 [shape = 'u32[144,128]{1,0:T(1,128)}', space=vmem, size = 0x12000, scoped, tag = 'internal scratch']
  %s0 = inlined_call_operand.hbm [shape: f32[2,8,8], index: 0, kind: input, shape index: {}]
  %s1 = inlined_call_operand.hbm [shape: f32[2,8,8], index: 1, kind: input, shape index: {}]
  %s2 = inlined_call_operand.hbm [shape: f32[8,8,8], index: 2, kind: input, shape index: {}]
  %s3 = inlined_call_operand.vmem [shape: f32[1,8], index: 3, kind: input, shape index: {}]
  %s4 = inlined_call_operand.vmem [shape: f32[8,8], index: 4, kind: input, shape index: {}]
  %s5 = inlined_call_operand.vmem [shape: f32[1,8], index: 5, kind: input, shape index: {}]
  %s6 = inlined_call_operand.hbm [shape: f32[8,8,8], index: 6, kind: input, shape index: {}]
  %s7 = inlined_call_operand.vmem [shape: f32[8,1,8], index: 7, kind: input, shape index: {}]
  %s8 = inlined_call_operand.vmem [shape: f32[22], index: 8, kind: input, shape index: {}]
  %s9 = inlined_call_operand.hbm [shape: f32[2,8,8], index: 9, kind: output, shape index: {0}]
  %s10 = inlined_call_operand.hbm [shape: f32[2,8,8], index: 10, kind: output, shape index: {1}]
  %11 = xla_tuple %s9, %s10
  %s12 = sld [smem:[#allocation0]]
  $region101: #{tpu_custom_call.1} parent=0
    _
  %s14 = ssub.s32 1, %s12
  %s15 = scalar_select 0, %s14, %s12
  $region1: #{tpu_custom_call.1} parent=0
    #allocation2 [shape = 'u8[8192]{0}', space=vmem, size = 0x2000, scoped, tag = 'input window, operand 0, single buffered']
    #allocation3 [shape = 's32[2]{0}', space=sflag, size = 0x8, scoped, tag = 'scoped memory for tpu_custom_call.1']
    #allocation4 [shape = 's32[2]{0}', space=sflag, size = 0x8, scoped, tag = 'scoped memory for tpu_custom_call.1']
    #allocation5 [shape = 's32[2]{0}', space=sflag, size = 0x8, scoped, tag = 'scoped memory for tpu_custom_call.1']
    #allocation6 [shape = 'u8[8192]{0}', space=vmem, size = 0x2000, scoped, tag = 'input window, operand 1, single buffered']
    #allocation7 [shape = 's32[1]{0}', space=sflag, size = 0x4, scoped, tag = 'scoped memory for tpu_custom_call.1']
    #allocation8 [shape = 'u8[8192]{0}', space=vmem, size = 0x2000, scoped, tag = 'input window, operand 2']
    #allocation9 [shape = 'u8[8192]{0}', space=vmem, size = 0x2000, scoped, tag = 'input window, operand 6']
    #allocation10 [shape = 'u8[512]{0}', space=smem, size = 0x200, scoped, tag = 'input window, operand 8, single buffered']
    #allocation11 [shape = 'u8[8192]{0}', space=vmem, size = 0x2000, scoped, tag = 'output window, operand 0, single buffered']
    #allocation12 [shape = 'u8[8192]{0}', space=vmem, size = 0x2000, scoped, tag = 'output window, operand 1, single buffered']
    #allocation13 [shape = 's32[1]{0}', space=sflag, size = 0x4, scoped, tag = 'scoped memory for tpu_custom_call.1']
    %16 = vsyncpa [#allocation3], 0
    %17 = vsyncpa [#allocation7], 0
    %18 = vsyncpa [#allocation5], 0
    %19 = vsyncpa [#allocation4], 0
    %20 = vsyncpa [#allocation13], 0
    loop: start=0, step=1, limit=10
    $region2: #{tpu_custom_call.1} parent=1 // loop_pre_header
      _
    $region3: #{tpu_custom_call.1} parent=1 // loop_header
      %s22 = sphi 0, %s26
      %p23 = scmp.ge.s32.totalorder %s22, 10
      %s30 = sphi 0, %s30
      %s32 = sphi 0, %s30
      %s33 = sphi 0, %s32
      %s47 = sphi 0, %s33
      %s51 = sphi 0, %s51
      %s53 = sphi 0, %s51
      %s54 = sphi 0, %s53
      %s68 = sphi 0, %s54
      %s74 = sphi 0, %s76
      %s77 = sphi 0, %s74
      %s78 = sphi 0, %s77
      %s94 = sphi 0, %s78
      %s98 = sphi 0, %s98
      %s100 = sphi 0, %s98
      %s101 = sphi 0, %s100
      %s115 = sphi 0, %s101
      %s119 = sphi 0, %s119
      %s121 = sphi 0, %s119
      %s122 = sphi 0, %s121
      %s136 = sphi 0, %s122
      %s140 = sphi 0, %s140
      %s142 = sphi 0, %s140
      %s143 = sphi 0, %s142
      %s157 = sphi 0, %s143
      %s163 = sphi 0, %s165
      %s166 = sphi 0, %s163
      %s167 = sphi 0, %s166
      %s183 = sphi 0, %s167
      %s189 = sphi 0, %s191
      %s192 = sphi 0, %s189
      %s193 = sphi 0, %s192
      %s209 = sphi 0, %s193
      %s213 = sphi 0, %s213
      %s215 = sphi 0, %s213
      %s216 = sphi 0, %s215
      %s230 = sphi 0, %s216
      %s234 = sphi 0, %s234
      %s236 = sphi 0, %s234
      %s237 = sphi 0, %s236
      %s251 = sphi 0, %s237
      %s255 = sphi 0, %s255
      %s257 = sphi 0, %s255
      %s258 = sphi 0, %s257
      %s272 = sphi 0, %s258
    $region4: #{tpu_custom_call.1} parent=1 // loop_header_branch
      %25 = sbr.rel (%p23) target = $region8
    $region5: #{tpu_custom_call.1} parent=1 // loop_body
      %s27 = ssub.s32 %s22, 1
      %s28 = ssub.s32 %s22, 2
      %s29 = sadd.s32 %s22, 1
      %s31 = sadd.s32 %s30, 1
      %p34 = scmp.eq.s32.totalorder %s22, 7
      %p35 = scmp.ne.s32.totalorder %s30, %s32
      %p36 = scmp.eq.s32.totalorder %s22, 0
      %p37 = por %p35, %p36
      %p38 = scmp.ne.s32.totalorder %s30, %s32
      %p39 = scmp.eq.s32.totalorder %s27, 7
      %p40 = por %p38, %p39
      %p41 = scmp.ne.s32.totalorder %s32, %s33
      %p42 = scmp.eq.s32.totalorder %s27, 0
      %p43 = por %p41, %p42
      %p44 = scmp.ne.s32.totalorder %s32, %s33
      %p45 = scmp.eq.s32.totalorder %s28, 7
      %p46 = por %p44, %p45
      %p48 = scmp.ne.s32.totalorder %s33, %s47
      %p49 = scmp.eq.s32.totalorder %s28, 0
      %p50 = por %p48, %p49
      %s52 = sadd.s32 %s51, 1
      %p55 = scmp.eq.s32.totalorder %s22, 7
      %p56 = scmp.ne.s32.totalorder %s51, %s53
      %p57 = scmp.eq.s32.totalorder %s22, 0
      %p58 = por %p56, %p57
      %p59 = scmp.ne.s32.totalorder %s51, %s53
      %p60 = scmp.eq.s32.totalorder %s27, 7
      %p61 = por %p59, %p60
      %p62 = scmp.ne.s32.totalorder %s53, %s54
      %p63 = scmp.eq.s32.totalorder %s27, 0
      %p64 = por %p62, %p63
      %p65 = scmp.ne.s32.totalorder %s53, %s54
      %p66 = scmp.eq.s32.totalorder %s28, 7
      %p67 = por %p65, %p66
      %p69 = scmp.ne.s32.totalorder %s54, %s68
      %p70 = scmp.eq.s32.totalorder %s28, 0
      %p71 = por %p69, %p70
      %s72 = ssub.s32 %s22, %s29
      %p73 = scmp.eq.s32.totalorder %s72, 0
      %s75 = sadd.s32 %s74, 1
      %s76 = scalar_select %p73, %s74, %s75
      %p79 = pneg %p73
      %p80 = scmp.eq.s32.totalorder %s22, 7
      %p81 = por %p79, %p80
      %p82 = scmp.ne.s32.totalorder %s74, %s77
      %p83 = scmp.eq.s32.totalorder %s22, 0
      %p84 = por %p82, %p83
      %p85 = scmp.ne.s32.totalorder %s74, %s77
      %p86 = scmp.eq.s32.totalorder %s27, 7
      %p87 = por %p85, %p86
      %p88 = scmp.ne.s32.totalorder %s77, %s78
      %p89 = scmp.eq.s32.totalorder %s27, 0
      %p90 = por %p88, %p89
      %p91 = scmp.ne.s32.totalorder %s77, %s78
      %p92 = scmp.eq.s32.totalorder %s28, 7
      %p93 = por %p91, %p92
      %p95 = scmp.ne.s32.totalorder %s78, %s94
      %p96 = scmp.eq.s32.totalorder %s28, 0
      %p97 = por %p95, %p96
      %s99 = sadd.s32 %s98, 1
      %p102 = scmp.eq.s32.totalorder %s22, 7
      %p103 = scmp.ne.s32.totalorder %s98, %s100
      %p104 = scmp.eq.s32.totalorder %s22, 0
      %p105 = por %p103, %p104
      %p106 = scmp.ne.s32.totalorder %s98, %s100
      %p107 = scmp.eq.s32.totalorder %s27, 7
      %p108 = por %p106, %p107
      %p109 = scmp.ne.s32.totalorder %s100, %s101
      %p110 = scmp.eq.s32.totalorder %s27, 0
      %p111 = por %p109, %p110
      %p112 = scmp.ne.s32.totalorder %s100, %s101
      %p113 = scmp.eq.s32.totalorder %s28, 7
      %p114 = por %p112, %p113
      %p116 = scmp.ne.s32.totalorder %s101, %s115
      %p117 = scmp.eq.s32.totalorder %s28, 0
      %p118 = por %p116, %p117
      %s120 = sadd.s32 %s119, 1
      %p123 = scmp.eq.s32.totalorder %s22, 7
      %p124 = scmp.ne.s32.totalorder %s119, %s121
      %p125 = scmp.eq.s32.totalorder %s22, 0
      %p126 = por %p124, %p125
      %p127 = scmp.ne.s32.totalorder %s119, %s121
      %p128 = scmp.eq.s32.totalorder %s27, 7
      %p129 = por %p127, %p128
      %p130 = scmp.ne.s32.totalorder %s121, %s122
      %p131 = scmp.eq.s32.totalorder %s27, 0
      %p132 = por %p130, %p131
      %p133 = scmp.ne.s32.totalorder %s121, %s122
      %p134 = scmp.eq.s32.totalorder %s28, 7
      %p135 = por %p133, %p134
      %p137 = scmp.ne.s32.totalorder %s122, %s136
      %p138 = scmp.eq.s32.totalorder %s28, 0
      %p139 = por %p137, %p138
      %s141 = sadd.s32 %s140, 1
      %p144 = scmp.eq.s32.totalorder %s22, 7
      %p145 = scmp.ne.s32.totalorder %s140, %s142
      %p146 = scmp.eq.s32.totalorder %s22, 0
      %p147 = por %p145, %p146
      %p148 = scmp.ne.s32.totalorder %s140, %s142
      %p149 = scmp.eq.s32.totalorder %s27, 7
      %p150 = por %p148, %p149
      %p151 = scmp.ne.s32.totalorder %s142, %s143
      %p152 = scmp.eq.s32.totalorder %s27, 0
      %p153 = por %p151, %p152
      %p154 = scmp.ne.s32.totalorder %s142, %s143
      %p155 = scmp.eq.s32.totalorder %s28, 7
      %p156 = por %p154, %p155
      %p158 = scmp.ne.s32.totalorder %s143, %s157
      %p159 = scmp.eq.s32.totalorder %s28, 0
      %p160 = por %p158, %p159
      %s161 = ssub.s32 %s22, %s29
      %p162 = scmp.eq.s32.totalorder %s161, 0
      %s164 = sadd.s32 %s163, 1
      %s165 = scalar_select %p162, %s163, %s164
      %p168 = pneg %p162
      %p169 = scmp.eq.s32.totalorder %s22, 7
      %p170 = por %p168, %p169
      %p171 = scmp.ne.s32.totalorder %s163, %s166
      %p172 = scmp.eq.s32.totalorder %s22, 0
      %p173 = por %p171, %p172
      %p174 = scmp.ne.s32.totalorder %s163, %s166
      %p175 = scmp.eq.s32.totalorder %s27, 7
      %p176 = por %p174, %p175
      %p177 = scmp.ne.s32.totalorder %s166, %s167
      %p178 = scmp.eq.s32.totalorder %s27, 0
      %p179 = por %p177, %p178
      %p180 = scmp.ne.s32.totalorder %s166, %s167
      %p181 = scmp.eq.s32.totalorder %s28, 7
      %p182 = por %p180, %p181
      %p184 = scmp.ne.s32.totalorder %s167, %s183
      %p185 = scmp.eq.s32.totalorder %s28, 0
      %p186 = por %p184, %p185
      %s187 = ssub.s32 %s22, %s29
      %p188 = scmp.eq.s32.totalorder %s187, 0
      %s190 = sadd.s32 %s189, 1
      %s191 = scalar_select %p188, %s189, %s190
      %p194 = pneg %p188
      %p195 = scmp.eq.s32.totalorder %s22, 7
      %p196 = por %p194, %p195
      %p197 = scmp.ne.s32.totalorder %s189, %s192
      %p198 = scmp.eq.s32.totalorder %s22, 0
      %p199 = por %p197, %p198
      %p200 = scmp.ne.s32.totalorder %s189, %s192
      %p201 = scmp.eq.s32.totalorder %s27, 7
      %p202 = por %p200, %p201
      %p203 = scmp.ne.s32.totalorder %s192, %s193
      %p204 = scmp.eq.s32.totalorder %s27, 0
      %p205 = por %p203, %p204
      %p206 = scmp.ne.s32.totalorder %s192, %s193
      %p207 = scmp.eq.s32.totalorder %s28, 7
      %p208 = por %p206, %p207
      %p210 = scmp.ne.s32.totalorder %s193, %s209
      %p211 = scmp.eq.s32.totalorder %s28, 0
      %p212 = por %p210, %p211
      %s214 = sadd.s32 %s213, 1
      %p217 = scmp.eq.s32.totalorder %s22, 7
      %p218 = scmp.ne.s32.totalorder %s213, %s215
      %p219 = scmp.eq.s32.totalorder %s22, 0
      %p220 = por %p218, %p219
      %p221 = scmp.ne.s32.totalorder %s213, %s215
      %p222 = scmp.eq.s32.totalorder %s27, 7
      %p223 = por %p221, %p222
      %p224 = scmp.ne.s32.totalorder %s215, %s216
      %p225 = scmp.eq.s32.totalorder %s27, 0
      %p226 = por %p224, %p225
      %p227 = scmp.ne.s32.totalorder %s215, %s216
      %p228 = scmp.eq.s32.totalorder %s28, 7
      %p229 = por %p227, %p228
      %p231 = scmp.ne.s32.totalorder %s216, %s230
      %p232 = scmp.eq.s32.totalorder %s28, 0
      %p233 = por %p231, %p232
      %s235 = sadd.s32 %s234, 1
      %p238 = scmp.eq.s32.totalorder %s22, 7
      %p239 = scmp.ne.s32.totalorder %s234, %s236
      %p240 = scmp.eq.s32.totalorder %s22, 0
      %p241 = por %p239, %p240
      %p242 = scmp.ne.s32.totalorder %s234, %s236
      %p243 = scmp.eq.s32.totalorder %s27, 7
      %p244 = por %p242, %p243
      %p245 = scmp.ne.s32.totalorder %s236, %s237
      %p246 = scmp.eq.s32.totalorder %s27, 0
      %p247 = por %p245, %p246
      %p248 = scmp.ne.s32.totalorder %s236, %s237
      %p249 = scmp.eq.s32.totalorder %s28, 7
      %p250 = por %p248, %p249
      %p252 = scmp.ne.s32.totalorder %s237, %s251
      %p253 = scmp.eq.s32.totalorder %s28, 0
      %p254 = por %p252, %p253
      %s256 = sadd.s32 %s255, 1
      %p259 = scmp.eq.s32.totalorder %s22, 7
      %p260 = scmp.ne.s32.totalorder %s255, %s257
      %p261 = scmp.eq.s32.totalorder %s22, 0
      %p262 = por %p260, %p261
      %p263 = scmp.ne.s32.totalorder %s255, %s257
      %p264 = scmp.eq.s32.totalorder %s27, 7
      %p265 = por %p263, %p264
      %p266 = scmp.ne.s32.totalorder %s257, %s258
      %p267 = scmp.eq.s32.totalorder %s27, 0
      %p268 = por %p266, %p267
      %p269 = scmp.ne.s32.totalorder %s257, %s258
      %p270 = scmp.eq.s32.totalorder %s28, 7
      %p271 = por %p269, %p270
      %p273 = scmp.ne.s32.totalorder %s258, %s272
      %p274 = scmp.eq.s32.totalorder %s28, 0
      %p275 = por %p273, %p274
      %p276 = scmp.le.s32.totalorder 1, %s22
      %p277 = scmp.lt.s32.totalorder %s22, 9
      %p278 = pnand %p276, %p277
      %p279 = pneg %p278
      // Predicated region
      $region9: #{tpu_custom_call.1} parent=5 // pred_check
        _
      $region10: #{tpu_custom_call.1} parent=5 // pred_check_branch
        %281 = sbr.rel (%p278) target = $region12
      $region11: #{tpu_custom_call.1} parent=5 // pred_region
        %s282 = ssub.s32 %s22, 1
        // Predicated region
        $region13: #{tpu_custom_call.1} parent=11 // pred_check
          %p283 = pneg %p43
        $region14: #{tpu_custom_call.1} parent=11 // pred_check_branch
          %285 = sbr.rel (%p283) target = $region16
        $region15: #{tpu_custom_call.1} parent=11 // pred_region
          %s287 = ssub.s32 256, 256
          %288 = vsyncadd [#allocation3], %s287
          %s289 = sshll.u32 [#allocation2], 4
          %s290 = int_to_ptr.vmem [resolvable:$true] %s289
          %295 = dma.hbm_to_vmem [thread:$0]  %s0, 256, %s290, [#allocation3], 128, 128, 8
        $region16: #{tpu_custom_call.1} parent=11 // pred_fallthru
          _
        // Predicated region
        $region17: #{tpu_custom_call.1} parent=11 // pred_check
          %p296 = pneg %p64
        $region18: #{tpu_custom_call.1} parent=11 // pred_check_branch
          %298 = sbr.rel (%p296) target = $region20
        $region19: #{tpu_custom_call.1} parent=11 // pred_region
          %s300 = ssub.s32 256, 256
          %301 = vsyncadd [#allocation7], %s300
          %s302 = sshll.u32 [#allocation6], 4
          %s303 = int_to_ptr.vmem [resolvable:$true] %s302
          %308 = dma.hbm_to_vmem [thread:$0]  %s1, 256, %s303, [#allocation7], 128, 128, 8
        $region20: #{tpu_custom_call.1} parent=11 // pred_fallthru
          _
        // Predicated region
        $region21: #{tpu_custom_call.1} parent=11 // pred_check
          %p309 = pneg %p111
        $region22: #{tpu_custom_call.1} parent=11 // pred_check_branch
          %311 = sbr.rel (%p309) target = $region24
        $region23: #{tpu_custom_call.1} parent=11 // pred_region
          _
        $region24: #{tpu_custom_call.1} parent=11 // pred_fallthru
          _
        // Predicated region
        $region25: #{tpu_custom_call.1} parent=11 // pred_check
          %p312 = pneg %p132
        $region26: #{tpu_custom_call.1} parent=11 // pred_check_branch
          %314 = sbr.rel (%p312) target = $region28
        $region27: #{tpu_custom_call.1} parent=11 // pred_region
          _
        $region28: #{tpu_custom_call.1} parent=11 // pred_fallthru
          _
        // Predicated region
        $region29: #{tpu_custom_call.1} parent=11 // pred_check
          %p315 = pneg %p153
        $region30: #{tpu_custom_call.1} parent=11 // pred_check_branch
          %317 = sbr.rel (%p315) target = $region32
        $region31: #{tpu_custom_call.1} parent=11 // pred_region
          _
        $region32: #{tpu_custom_call.1} parent=11 // pred_fallthru
          _
        // Predicated region
        $region33: #{tpu_custom_call.1} parent=11 // pred_check
          %p318 = pneg %p226
        $region34: #{tpu_custom_call.1} parent=11 // pred_check_branch
          %320 = sbr.rel (%p318) target = $region36
        $region35: #{tpu_custom_call.1} parent=11 // pred_region
          %s322 = ssub.s32 16, 16
          %323 = vsyncadd [#allocation5], %s322
          %s325 = sshll.u32 %s8, 4
          %s326 = int_to_ptr.vmem [resolvable:$true] %s325
          %328 = dma.vmem_to_smem %s326, 16, [#allocation10], [#allocation5]
        $region36: #{tpu_custom_call.1} parent=11 // pred_fallthru
          _
      $region12: #{tpu_custom_call.1} parent=5 // pred_fallthru
        _
      %p329 = scmp.lt.s32.totalorder %s22, 8
      // Predicated region
      $region37: #{tpu_custom_call.1} parent=5 // pred_check
        %p330 = pneg %p329
      $region38: #{tpu_custom_call.1} parent=5 // pred_check_branch
        %332 = sbr.rel (%p330) target = $region40
      $region39: #{tpu_custom_call.1} parent=5 // pred_region
        // Predicated region
        $region41: #{tpu_custom_call.1} parent=39 // pred_check
          %p333 = pneg %p84
        $region42: #{tpu_custom_call.1} parent=39 // pred_check_branch
          %335 = sbr.rel (%p333) target = $region44
        $region43: #{tpu_custom_call.1} parent=39 // pred_region
          %s336 = sand.u32 %s22, 1
          %s337 = scalar_lea.sflag [#allocation3], %s336
          %s338 = sand.u32 %s74, 1
          %s339 = smul.addr %s338, 8
          %s340 = scalar_lea.vmem [#allocation8], %s339
          %s342 = ssub.s32 128, 128
          %343 = vsyncadd %s337, %s342
          %s344 = smul.addr %s22, 128
          %s345 = scalar_lea.hbm %s2, %s344
          %s347 = sshll.u32 %s340, 4
          %s348 = int_to_ptr.vmem [resolvable:$true] %s347
          %350 = dma.hbm_to_vmem [thread:$0]  %s345, 128, %s348, %s337
        $region44: #{tpu_custom_call.1} parent=39 // pred_fallthru
          _
        // Predicated region
        $region45: #{tpu_custom_call.1} parent=39 // pred_check
          %p351 = pneg %p173
        $region46: #{tpu_custom_call.1} parent=39 // pred_check_branch
          %353 = sbr.rel (%p351) target = $region48
        $region47: #{tpu_custom_call.1} parent=39 // pred_region
          %s354 = sand.u32 %s22, 1
          %s355 = scalar_lea.sflag [#allocation3], %s354
          %s356 = sand.u32 %s163, 1
          %s357 = smul.addr %s356, 8
          %s358 = scalar_lea.vmem [#allocation9], %s357
          %s360 = ssub.s32 128, 128
          %361 = vsyncadd %s355, %s360
          %s362 = smul.addr %s22, 128
          %s363 = scalar_lea.hbm %s6, %s362
          %s365 = sshll.u32 %s358, 4
          %s366 = int_to_ptr.vmem [resolvable:$true] %s365
          %368 = dma.hbm_to_vmem [thread:$0]  %s363, 128, %s366, %s355
        $region48: #{tpu_custom_call.1} parent=39 // pred_fallthru
          _
        // Predicated region
        $region49: #{tpu_custom_call.1} parent=39 // pred_check
          %p369 = pneg %p199
        $region50: #{tpu_custom_call.1} parent=39 // pred_check_branch
          %371 = sbr.rel (%p369) target = $region52
        $region51: #{tpu_custom_call.1} parent=39 // pred_region
          %p372 = scmp.lt.s32.totalorder %s22, 7
          %s373 = scalar_select %p372, %s22, 7
          %s374 = scalar_lea.vmem %s7, %s373
        $region52: #{tpu_custom_call.1} parent=39 // pred_fallthru
          _
      $region40: #{tpu_custom_call.1} parent=5 // pred_fallthru
        _
      %p375 = scmp.le.s32.totalorder 1, %s22
      %p376 = scmp.lt.s32.totalorder %s22, 9
      %p377 = pnand %p375, %p376
      %p378 = pneg %p377
      // Predicated region
      $region53: #{tpu_custom_call.1} parent=5 // pred_check
        _
      $region54: #{tpu_custom_call.1} parent=5 // pred_check_branch
        %380 = sbr.rel (%p377) target = $region56
      $region55: #{tpu_custom_call.1} parent=5 // pred_region
        %s381 = ssub.s32 %s22, 1
        // Predicated region
        $region57: #{tpu_custom_call.1} parent=55 // pred_check
          %p382 = pneg %p43
        $region58: #{tpu_custom_call.1} parent=55 // pred_check_branch
          %384 = sbr.rel (%p382) target = $region60
        $region59: #{tpu_custom_call.1} parent=55 // pred_region
          %385 = dma.done [#allocation3], 256
        $region60: #{tpu_custom_call.1} parent=55 // pred_fallthru
          _
        // Predicated region
        $region61: #{tpu_custom_call.1} parent=55 // pred_check
          %p386 = pneg %p64
        $region62: #{tpu_custom_call.1} parent=55 // pred_check_branch
          %388 = sbr.rel (%p386) target = $region64
        $region63: #{tpu_custom_call.1} parent=55 // pred_region
          %389 = dma.done [#allocation7], 256
        $region64: #{tpu_custom_call.1} parent=55 // pred_fallthru
          _
        %s390 = sand.u32 %s27, 1
        %s391 = scalar_lea.sflag [#allocation3], %s390
        %s392 = sand.u32 %s77, 1
        %s393 = smul.addr %s392, 8
        %s394 = scalar_lea.vmem [#allocation8], %s393
        // Predicated region
        $region65: #{tpu_custom_call.1} parent=55 // pred_check
          %p395 = pneg %p90
        $region66: #{tpu_custom_call.1} parent=55 // pred_check_branch
          %397 = sbr.rel (%p395) target = $region68
        $region67: #{tpu_custom_call.1} parent=55 // pred_region
          %398 = dma.done %s391, 128
        $region68: #{tpu_custom_call.1} parent=55 // pred_fallthru
          _
        %s399 = sand.u32 %s27, 1
        %s400 = scalar_lea.sflag [#allocation3], %s399
        %s401 = sand.u32 %s166, 1
        %s402 = smul.addr %s401, 8
        %s403 = scalar_lea.vmem [#allocation9], %s402
        // Predicated region
        $region69: #{tpu_custom_call.1} parent=55 // pred_check
          %p404 = pneg %p179
        $region70: #{tpu_custom_call.1} parent=55 // pred_check_branch
          %406 = sbr.rel (%p404) target = $region72
        $region71: #{tpu_custom_call.1} parent=55 // pred_region
          %407 = dma.done %s400, 128
        $region72: #{tpu_custom_call.1} parent=55 // pred_fallthru
          _
        // Predicated region
        $region73: #{tpu_custom_call.1} parent=55 // pred_check
          %p408 = pneg %p226
        $region74: #{tpu_custom_call.1} parent=55 // pred_check_branch
          %410 = sbr.rel (%p408) target = $region76
        $region75: #{tpu_custom_call.1} parent=55 // pred_region
          %411 = dma.done [#allocation5], 16
        $region76: #{tpu_custom_call.1} parent=55 // pred_fallthru
          _
        %412 = sfence
        %p413 = pneg %p43
        %p414 = pneg %p40
        %p415 = pneg %p64
        %p416 = pneg %p61
        %s417 = sand.u32 %s27, 1
        %s418 = scalar_lea.sflag [#allocation3], %s417
        %s419 = sand.u32 %s77, 1
        %s420 = smul.addr %s419, 8
        %s421 = scalar_lea.vmem [#allocation8], %s420
        %p422 = pneg %p90
        %p423 = pneg %p87
        %p424 = pneg %p111
        %p425 = pneg %p108
        %p426 = pneg %p132
        %p427 = pneg %p129
        %p428 = pneg %p153
        %p429 = pneg %p150
        %s430 = sand.u32 %s27, 1
        %s431 = scalar_lea.sflag [#allocation3], %s430
        %s432 = sand.u32 %s166, 1
        %s433 = smul.addr %s432, 8
        %s434 = scalar_lea.vmem [#allocation9], %s433
        %p435 = pneg %p179
        %p436 = pneg %p176
        %p437 = scmp.lt.s32.totalorder %s27, 7
        %s438 = scalar_select %p437, %s27, 7
        %s439 = scalar_lea.vmem %s7, %s438
        %p440 = pneg %p205
        %p441 = pneg %p202
        %p442 = pneg %p226
        %p443 = pneg %p223
        %p444 = pneg %p247
        %p445 = pneg %p244
        %p446 = pneg %p268
        %p447 = pneg %p265
        %p448 = scmp.lt.s32.totalorder %s27, 7
        %s449 = scalar_select %p448, %s27, 7
        %s450 = scalar_lea.vmem %s7, %s449
        %p451 = scmp.eq.s32.totalorder %s27, 0
        // Predicated region
        $region77: #{tpu_custom_call.1} parent=55 // pred_check
          %p452 = pneg %p451
        $region78: #{tpu_custom_call.1} parent=55 // pred_check_branch
          %454 = sbr.rel (%p452) target = $region80
        $region79: #{tpu_custom_call.1} parent=55 // pred_region
          %v455 = vld [vmem:[#allocation2] sm:$0xff]
          %v456 = vld [vmem:[#allocation2 + $0x8] sm:$0xff]
          %vm457 = vcmask 64512
          %458 = vst.msk [vmem:[#allocation11] sm:$0xff] %vm457, %v455
          %459 = vst.msk [vmem:[#allocation11 + $0x8] sm:$0xff] %vm457, %v456
          %v460 = vld [vmem:[#allocation6] sm:$0xff]
          %v461 = vld [vmem:[#allocation6 + $0x8] sm:$0xff]
          %462 = vst.msk [vmem:[#allocation12] sm:$0xff] %vm457, %v460
          %463 = vst.msk [vmem:[#allocation12 + $0x8] sm:$0xff] %vm457, %v461
        $region80: #{tpu_custom_call.1} parent=55 // pred_fallthru
          _
        %v464 = vld [vmem:[#allocation11] sm:$0xff]
        %v465 = vld [vmem:[#allocation11 + $0x8] sm:$0xff]
        %v466 = vld [vmem:[#allocation12] sm:$0xff]
        %v467 = vld [vmem:[#allocation12 + $0x8] sm:$0xff]
        %v468 = vlaneseq
        %v469 = vand.u32 %v468, 127
        %v470 = vstv %s27
        %vm471 = vcmp.eq.s32.totalorder %v469, %v470
        %v472 = vsel %vm471, 1, 0
        %v473 = vcvt.s32.f32 %v472
        %v474 = vlaneseq
        %v475 = vshrl.u32 %v474, 7
        %vm476 = vcmp.eq.s32.totalorder %v475, %v470
        %v477 = vsel %vm476, 1, 0
        %v478 = vcvt.s32.f32 %v477
        %v479 = vsub.f32 1.0, %v473
        %v480 = vsub.f32 1.0, %v478
        %v481 = vmul.f32 %v464, %v473
        %v482 = vmul.f32 %v465, %v473
        %vm483 = vcmask 64512
        %v484 = vsel %vm483, %v481, 0.0
        %485 = vadd.xlane.f32.xlu0 %v484
        %v486 = vpop.xlane.xlu0 %485
        %v487 = vsel %vm483, %v482, 0.0
        %488 = vadd.xlane.f32.xlu0 %v487
        %v489 = vpop.xlane.xlu0 %488
        %492 = vbcast.lane.b32.xlu0 %v473, 256
        %v493 = vpop.permute.xlu0 %492
        %v495 = vmul.f32 %v486, %v493
        %v496 = vmul.f32 %v489, %v493
        %499 = vset.pattern.permute.xlu0 0
        %500 = vperm.xlu0 %499, %v495
        %v501 = vpop.permute.xlu0 %500
        %502 = vset.pattern.permute.xlu0 0
        %503 = vperm.xlu0 %502, %v496
        %v504 = vpop.permute.xlu0 %503
        %v505 = vlaneseq
        %v506 = vshrl.u32 %v505, 7
        %v507 = vsub.s32 %v469, %v506
        %v508 = vrot.slane %v501, %v507
        %v509 = vlaneseq
        %v510 = vshrl.u32 %v509, 7
        %v511 = vsub.s32 %v469, %v510
        %v512 = vrot.slane %v504, %v511
        %vm513 = vcmask 1041409
        %v514 = vsel %vm513, %v512, %v508
        %vm516 = vcmask 58368
        %v517 = vsel %vm516, %v514, 0.0
        %518 = vadd.xlane.f32.xlu0 %v517
        %v519 = vpop.xlane.xlu0 %518
        %522 = vbcast.lane.b32.xlu0 %v479, 256
        %v523 = vpop.permute.xlu0 %522
        %v525 = vmul.f32 %v486, %v523
        %v526 = vmul.f32 %v489, %v523
        %v527 = vmul.f32 %v466, %v473
        %v528 = vmul.f32 %v467, %v473
        %v529 = vsel %vm483, %v527, 0.0
        %530 = vadd.xlane.f32.xlu0 %v529
        %v531 = vpop.xlane.xlu0 %530
        %v532 = vsel %vm483, %v528, 0.0
        %533 = vadd.xlane.f32.xlu0 %v532
        %v534 = vpop.xlane.xlu0 %533
        %v535 = vmul.f32 %v531, %v493
        %v536 = vmul.f32 %v534, %v493
        %539 = vset.pattern.permute.xlu0 0
        %540 = vperm.xlu0 %539, %v535
        %v541 = vpop.permute.xlu0 %540
        %542 = vset.pattern.permute.xlu0 0
        %543 = vperm.xlu0 %542, %v536
        %v544 = vpop.permute.xlu0 %543
        %v545 = vlaneseq
        %v546 = vshrl.u32 %v545, 7
        %v547 = vsub.s32 %v469, %v546
        %v548 = vrot.slane %v541, %v547
        %v549 = vlaneseq
        %v550 = vshrl.u32 %v549, 7
        %v551 = vsub.s32 %v469, %v550
        %v552 = vrot.slane %v544, %v551
        %v553 = vsel %vm513, %v552, %v548
        %v555 = vsel %vm516, %v553, 0.0
        %556 = vadd.xlane.f32.xlu0 %v555
        %v557 = vpop.xlane.xlu0 %556
        %v558 = vmul.f32 %v531, %v523
        %v559 = vmul.f32 %v534, %v523
        %v560 = vld [vmem:[%s394] sm:$0xff]
        %v561 = vld [vmem:[%s3] sm:$0x1]
        %v563 = vlaneseq
        %v564 = vshrl.u32 %v563, 7
        %v565 = vsub.s32 0, %v564
        %v566 = vrot.slane %v561, %v565
        %570 = vset.pattern.permute.xlu0 0
        %571 = vperm.xlu0 %570, %v525
        %v572 = vpop.permute.xlu0 %571
        %573 = vset.pattern.permute.xlu0 0
        %574 = vperm.xlu0 %573, %v526
        %v575 = vpop.permute.xlu0 %574
        %v576 = vlaneseq
        %v577 = vshrl.u32 %v576, 7
        %v578 = vsub.s32 %v469, %v577
        %v579 = vrot.slane %v572, %v578
        %v580 = vlaneseq
        %v581 = vshrl.u32 %v580, 7
        %v582 = vsub.s32 %v469, %v581
        %v583 = vrot.slane %v575, %v582
        %v584 = vsel %vm513, %v583, %v579
        %v585 = vsel %vm483, %v584, 0
        %587 = vmatprep.subr.mxu0 0.0
        %v588 = vand.u32 %v560, 4294901760
        %589 = vmatpush1.msra.mxu0 %v588
        %590 = vmatprep.subr.mxu0 0.0
        %591 = vmatpush1.msra.mxu0 0.0
        %592 = vmatprep.subr.mxu0 0.0
        %593 = vmatpush1.msra.mxu0 0.0
        %594 = vmatprep.subr.mxu0 0.0
        %595 = vmatpush1.msra.mxu0 0.0
        %596 = vmatprep.subr.mxu0 0.0
        %597 = vmatpush1.msra.mxu0 0.0
        %598 = vmatprep.subr.mxu0 0.0
        %599 = vmatpush1.msra.mxu0 0.0
        %600 = vmatprep.subr.mxu0 0.0
        %601 = vmatpush1.msra.mxu0 0.0
        %602 = vmatprep.subr.mxu0 0.0
        %603 = vmatpush1.msra.mxu0 0.0
        %604 = vmatprep.subr.mxu0 0.0
        %605 = vmatpush1.msra.mxu0 0.0
        %606 = vmatprep.subr.mxu0 0.0
        %607 = vmatpush1.msra.mxu0 0.0
        %608 = vmatprep.subr.mxu0 0.0
        %609 = vmatpush1.msra.mxu0 0.0
        %610 = vmatprep.subr.mxu0 0.0
        %611 = vmatpush1.msra.mxu0 0.0
        %612 = vmatprep.subr.mxu0 0.0
        %613 = vmatpush1.msra.mxu0 0.0
        %614 = vmatprep.subr.mxu0 0.0
        %615 = vmatpush1.msra.mxu0 0.0
        %616 = vmatprep.subr.mxu0 0.0
        %617 = vmatpush1.msra.mxu0 0.0
        %618 = vmatprep.subr.mxu0 0.0
        %619 = vmatpush1.msra.mxu0 0.0
        %620 = vmatprep.subr.mxu0 0.0
        %621 = vmatpush1.msra.mxu0 0.0
        %622 = vmatprep.subr.mxu0 0.0
        %623 = vmatpush1.msra.mxu0 0.0
        %624 = vmatprep.subr.mxu0 0.0
        %625 = vmatpush1.msra.mxu0 0.0
        %626 = vmatprep.subr.mxu0 0.0
        %627 = vmatpush1.msra.mxu0 0.0
        %628 = vmatprep.subr.mxu0 0.0
        %629 = vmatpush1.msra.mxu0 0.0
        %630 = vmatprep.subr.mxu0 0.0
        %631 = vmatpush1.msra.mxu0 0.0
        %632 = vmatprep.subr.mxu0 0.0
        %633 = vmatpush1.msra.mxu0 0.0
        %634 = vmatprep.subr.mxu0 0.0
        %635 = vmatpush1.msra.mxu0 0.0
        %636 = vmatprep.subr.mxu0 0.0
        %637 = vmatpush1.msra.mxu0 0.0
        %638 = vmatprep.subr.mxu0 0.0
        %639 = vmatpush1.msra.mxu0 0.0
        %640 = vmatprep.subr.mxu0 0.0
        %641 = vmatpush1.msra.mxu0 0.0
        %642 = vmatprep.subr.mxu0 0.0
        %643 = vmatpush1.msra.mxu0 0.0
        %644 = vmatprep.subr.mxu0 0.0
        %645 = vmatpush1.msra.mxu0 0.0
        %646 = vmatprep.subr.mxu0 0.0
        %647 = vmatpush1.msra.mxu0 0.0
        %648 = vmatprep.subr.mxu0 0.0
        %649 = vmatpush1.msra.mxu0 0.0
        %650 = vmatprep.subr.mxu0 0.0
        %651 = vmatpush1.msra.mxu0 0.0
        %652 = vmatprep.mubr.f32.mxu0 0.0
        %v653 = vand.u32 %v585, 4294901760
        %v654 = vsub.f32 %v585, %v653
        %v655 = vand.u32 %v654, 4294901760
        %v656 = vsub.f32 %v654, %v655
        %v657 = vand.u32 %v656, 4294901760
        %658 = vmatmul.mubr.f32.gmra.mrb[0].mxu0 %v657
        %v659 = vpop.f32.mrb[0].mxu0
        %v660 = vadd.f32 %v566, %v659
        %v661 = vpop.f32.mrb[0].mxu0
        %662 = vdwg.mxu0
        %663 = vmatprep.subr.mxu0 0.0
        %v664 = vand.u32 %v560, 4294901760
        %v665 = vsub.f32 %v560, %v664
        %v666 = vand.u32 %v665, 4294901760
        %v667 = vsub.f32 %v665, %v666
        %v668 = vand.u32 %v667, 4294901760
        %669 = vmatpush1.msra.mxu0 %v668
        %670 = vmatprep.subr.mxu0 0.0
        %671 = vmatpush1.msra.mxu0 0.0
        %672 = vmatprep.subr.mxu0 0.0
        %673 = vmatpush1.msra.mxu0 0.0
        %674 = vmatprep.subr.mxu0 0.0
        %675 = vmatpush1.msra.mxu0 0.0
        %676 = vmatprep.subr.mxu0 0.0
        %677 = vmatpush1.msra.mxu0 0.0
        %678 = vmatprep.subr.mxu0 0.0
        %679 = vmatpush1.msra.mxu0 0.0
        %680 = vmatprep.subr.mxu0 0.0
        %681 = vmatpush1.msra.mxu0 0.0
        %682 = vmatprep.subr.mxu0 0.0
        %683 = vmatpush1.msra.mxu0 0.0
        %684 = vmatprep.subr.mxu0 0.0
        %685 = vmatpush1.msra.mxu0 0.0
        %686 = vmatprep.subr.mxu0 0.0
        %687 = vmatpush1.msra.mxu0 0.0
        %688 = vmatprep.subr.mxu0 0.0
        %689 = vmatpush1.msra.mxu0 0.0
        %690 = vmatprep.subr.mxu0 0.0
        %691 = vmatpush1.msra.mxu0 0.0
        %692 = vmatprep.subr.mxu0 0.0
        %693 = vmatpush1.msra.mxu0 0.0
        %694 = vmatprep.subr.mxu0 0.0
        %695 = vmatpush1.msra.mxu0 0.0
        %696 = vmatprep.subr.mxu0 0.0
        %697 = vmatpush1.msra.mxu0 0.0
        %698 = vmatprep.subr.mxu0 0.0
        %699 = vmatpush1.msra.mxu0 0.0
        %700 = vmatprep.subr.mxu0 0.0
        %701 = vmatpush1.msra.mxu0 0.0
        %702 = vmatprep.subr.mxu0 0.0
        %703 = vmatpush1.msra.mxu0 0.0
        %704 = vmatprep.subr.mxu0 0.0
        %705 = vmatpush1.msra.mxu0 0.0
        %706 = vmatprep.subr.mxu0 0.0
        %707 = vmatpush1.msra.mxu0 0.0
        %708 = vmatprep.subr.mxu0 0.0
        %709 = vmatpush1.msra.mxu0 0.0
        %710 = vmatprep.subr.mxu0 0.0
        %711 = vmatpush1.msra.mxu0 0.0
        %712 = vmatprep.subr.mxu0 0.0
        %713 = vmatpush1.msra.mxu0 0.0
        %714 = vmatprep.subr.mxu0 0.0
        %715 = vmatpush1.msra.mxu0 0.0
        %716 = vmatprep.subr.mxu0 0.0
        %717 = vmatpush1.msra.mxu0 0.0
        %718 = vmatprep.subr.mxu0 0.0
        %719 = vmatpush1.msra.mxu0 0.0
        %720 = vmatprep.subr.mxu0 0.0
        %721 = vmatpush1.msra.mxu0 0.0
        %722 = vmatprep.subr.mxu0 0.0
        %723 = vmatpush1.msra.mxu0 0.0
        %724 = vmatprep.subr.mxu0 0.0
        %725 = vmatpush1.msra.mxu0 0.0
        %726 = vmatprep.subr.mxu0 0.0
        %727 = vmatpush1.msra.mxu0 0.0
        %728 = vmatprep.subr.mxu0 0.0
        %729 = vmatpush1.msra.mxu0 0.0
        %730 = vmatprep.subr.mxu0 0.0
        %731 = vmatpush1.msra.mxu0 0.0
        %732 = vmatprep.mubr.f32.mxu0 0.0
        %v733 = vand.u32 %v585, 4294901760
        %734 = vmatmul.mubr.f32.gmra.mrb[0].mxu0 %v733
        %v735 = vpop.f32.mrb[0].mxu0
        %v736 = vadd.f32 %v660, %v735
        %v737 = vpop.f32.mrb[0].mxu0
        %738 = vdwg.mxu0
        %739 = vmatprep.subr.mxu0 0.0
        %v740 = vand.u32 %v560, 4294901760
        %v741 = vsub.f32 %v560, %v740
        %742 = vmatpush1.msra.mxu0 %v741
        %743 = vmatprep.subr.mxu0 0.0
        %744 = vmatpush1.msra.mxu0 0.0
        %745 = vmatprep.subr.mxu0 0.0
        %746 = vmatpush1.msra.mxu0 0.0
        %747 = vmatprep.subr.mxu0 0.0
        %748 = vmatpush1.msra.mxu0 0.0
        %749 = vmatprep.subr.mxu0 0.0
        %750 = vmatpush1.msra.mxu0 0.0
        %751 = vmatprep.subr.mxu0 0.0
        %752 = vmatpush1.msra.mxu0 0.0
        %753 = vmatprep.subr.mxu0 0.0
        %754 = vmatpush1.msra.mxu0 0.0
        %755 = vmatprep.subr.mxu0 0.0
        %756 = vmatpush1.msra.mxu0 0.0
        %757 = vmatprep.subr.mxu0 0.0
        %758 = vmatpush1.msra.mxu0 0.0
        %759 = vmatprep.subr.mxu0 0.0
        %760 = vmatpush1.msra.mxu0 0.0
        %761 = vmatprep.subr.mxu0 0.0
        %762 = vmatpush1.msra.mxu0 0.0
        %763 = vmatprep.subr.mxu0 0.0
        %764 = vmatpush1.msra.mxu0 0.0
        %765 = vmatprep.subr.mxu0 0.0
        %766 = vmatpush1.msra.mxu0 0.0
        %767 = vmatprep.subr.mxu0 0.0
        %768 = vmatpush1.msra.mxu0 0.0
        %769 = vmatprep.subr.mxu0 0.0
        %770 = vmatpush1.msra.mxu0 0.0
        %771 = vmatprep.subr.mxu0 0.0
        %772 = vmatpush1.msra.mxu0 0.0
        %773 = vmatprep.subr.mxu0 0.0
        %774 = vmatpush1.msra.mxu0 0.0
        %775 = vmatprep.subr.mxu0 0.0
        %776 = vmatpush1.msra.mxu0 0.0
        %777 = vmatprep.subr.mxu0 0.0
        %778 = vmatpush1.msra.mxu0 0.0
        %779 = vmatprep.subr.mxu0 0.0
        %780 = vmatpush1.msra.mxu0 0.0
        %781 = vmatprep.subr.mxu0 0.0
        %782 = vmatpush1.msra.mxu0 0.0
        %783 = vmatprep.subr.mxu0 0.0
        %784 = vmatpush1.msra.mxu0 0.0
        %785 = vmatprep.subr.mxu0 0.0
        %786 = vmatpush1.msra.mxu0 0.0
        %787 = vmatprep.subr.mxu0 0.0
        %788 = vmatpush1.msra.mxu0 0.0
        %789 = vmatprep.subr.mxu0 0.0
        %790 = vmatpush1.msra.mxu0 0.0
        %791 = vmatprep.subr.mxu0 0.0
        %792 = vmatpush1.msra.mxu0 0.0
        %793 = vmatprep.subr.mxu0 0.0
        %794 = vmatpush1.msra.mxu0 0.0
        %795 = vmatprep.subr.mxu0 0.0
        %796 = vmatpush1.msra.mxu0 0.0
        %797 = vmatprep.subr.mxu0 0.0
        %798 = vmatpush1.msra.mxu0 0.0
        %799 = vmatprep.subr.mxu0 0.0
        %800 = vmatpush1.msra.mxu0 0.0
        %801 = vmatprep.subr.mxu0 0.0
        %802 = vmatpush1.msra.mxu0 0.0
        %803 = vmatprep.subr.mxu0 0.0
        %804 = vmatpush1.msra.mxu0 0.0
        %805 = vmatprep.mubr.f32.mxu0 0.0
        %v806 = vand.u32 %v585, 4294901760
        %v807 = vsub.f32 %v585, %v806
        %808 = vmatmul.mubr.f32.gmra.mrb[0].mxu0 %v807
        %v809 = vpop.f32.mrb[0].mxu0
        %v810 = vadd.f32 %v736, %v809
        %v811 = vpop.f32.mrb[0].mxu0
        %812 = vdwg.mxu0
        %813 = vmatprep.subr.mxu0 0.0
        %v814 = vand.u32 %v560, 4294901760
        %815 = vmatpush1.msra.mxu0 %v814
        %816 = vmatprep.subr.mxu0 0.0
        %817 = vmatpush1.msra.mxu0 0.0
        %818 = vmatprep.subr.mxu0 0.0
        %819 = vmatpush1.msra.mxu0 0.0
        %820 = vmatprep.subr.mxu0 0.0
        %821 = vmatpush1.msra.mxu0 0.0
        %822 = vmatprep.subr.mxu0 0.0
        %823 = vmatpush1.msra.mxu0 0.0
        %824 = vmatprep.subr.mxu0 0.0
        %825 = vmatpush1.msra.mxu0 0.0
        %826 = vmatprep.subr.mxu0 0.0
        %827 = vmatpush1.msra.mxu0 0.0
        %828 = vmatprep.subr.mxu0 0.0
        %829 = vmatpush1.msra.mxu0 0.0
        %830 = vmatprep.subr.mxu0 0.0
        %831 = vmatpush1.msra.mxu0 0.0
        %832 = vmatprep.subr.mxu0 0.0
        %833 = vmatpush1.msra.mxu0 0.0
        %834 = vmatprep.subr.mxu0 0.0
        %835 = vmatpush1.msra.mxu0 0.0
        %836 = vmatprep.subr.mxu0 0.0
        %837 = vmatpush1.msra.mxu0 0.0
        %838 = vmatprep.subr.mxu0 0.0
        %839 = vmatpush1.msra.mxu0 0.0
        %840 = vmatprep.subr.mxu0 0.0
        %841 = vmatpush1.msra.mxu0 0.0
        %842 = vmatprep.subr.mxu0 0.0
        %843 = vmatpush1.msra.mxu0 0.0
        %844 = vmatprep.subr.mxu0 0.0
        %845 = vmatpush1.msra.mxu0 0.0
        %846 = vmatprep.subr.mxu0 0.0
        %847 = vmatpush1.msra.mxu0 0.0
        %848 = vmatprep.subr.mxu0 0.0
        %849 = vmatpush1.msra.mxu0 0.0
        %850 = vmatprep.subr.mxu0 0.0
        %851 = vmatpush1.msra.mxu0 0.0
        %852 = vmatprep.subr.mxu0 0.0
        %853 = vmatpush1.msra.mxu0 0.0
        %854 = vmatprep.subr.mxu0 0.0
        %855 = vmatpush1.msra.mxu0 0.0
        %856 = vmatprep.subr.mxu0 0.0
        %857 = vmatpush1.msra.mxu0 0.0
        %858 = vmatprep.subr.mxu0 0.0
        %859 = vmatpush1.msra.mxu0 0.0
        %860 = vmatprep.subr.mxu0 0.0
        %861 = vmatpush1.msra.mxu0 0.0
        %862 = vmatprep.subr.mxu0 0.0
        %863 = vmatpush1.msra.mxu0 0.0
        %864 = vmatprep.subr.mxu0 0.0
        %865 = vmatpush1.msra.mxu0 0.0
        %866 = vmatprep.subr.mxu0 0.0
        %867 = vmatpush1.msra.mxu0 0.0
        %868 = vmatprep.subr.mxu0 0.0
        %869 = vmatpush1.msra.mxu0 0.0
        %870 = vmatprep.subr.mxu0 0.0
        %871 = vmatpush1.msra.mxu0 0.0
        %872 = vmatprep.subr.mxu0 0.0
        %873 = vmatpush1.msra.mxu0 0.0
        %874 = vmatprep.subr.mxu0 0.0
        %875 = vmatpush1.msra.mxu0 0.0
        %876 = vmatprep.subr.mxu0 0.0
        %877 = vmatpush1.msra.mxu0 0.0
        %878 = vmatprep.mubr.f32.mxu0 0.0
        %v879 = vand.u32 %v585, 4294901760
        %v880 = vsub.f32 %v585, %v879
        %v881 = vand.u32 %v880, 4294901760
        %882 = vmatmul.mubr.f32.gmra.mrb[0].mxu0 %v881
        %v883 = vpop.f32.mrb[0].mxu0
        %v884 = vadd.f32 %v810, %v883
        %v885 = vpop.f32.mrb[0].mxu0
        %886 = vdwg.mxu0
        %887 = vmatprep.subr.mxu0 0.0
        %v888 = vand.u32 %v560, 4294901760
        %v889 = vsub.f32 %v560, %v888
        %v890 = vand.u32 %v889, 4294901760
        %891 = vmatpush1.msra.mxu0 %v890
        %892 = vmatprep.subr.mxu0 0.0
        %893 = vmatpush1.msra.mxu0 0.0
        %894 = vmatprep.subr.mxu0 0.0
        %895 = vmatpush1.msra.mxu0 0.0
        %896 = vmatprep.subr.mxu0 0.0
        %897 = vmatpush1.msra.mxu0 0.0
        %898 = vmatprep.subr.mxu0 0.0
        %899 = vmatpush1.msra.mxu0 0.0
        %900 = vmatprep.subr.mxu0 0.0
        %901 = vmatpush1.msra.mxu0 0.0
        %902 = vmatprep.subr.mxu0 0.0
        %903 = vmatpush1.msra.mxu0 0.0
        %904 = vmatprep.subr.mxu0 0.0
        %905 = vmatpush1.msra.mxu0 0.0
        %906 = vmatprep.subr.mxu0 0.0
        %907 = vmatpush1.msra.mxu0 0.0
        %908 = vmatprep.subr.mxu0 0.0
        %909 = vmatpush1.msra.mxu0 0.0
        %910 = vmatprep.subr.mxu0 0.0
        %911 = vmatpush1.msra.mxu0 0.0
        %912 = vmatprep.subr.mxu0 0.0
        %913 = vmatpush1.msra.mxu0 0.0
        %914 = vmatprep.subr.mxu0 0.0
        %915 = vmatpush1.msra.mxu0 0.0
        %916 = vmatprep.subr.mxu0 0.0
        %917 = vmatpush1.msra.mxu0 0.0
        %918 = vmatprep.subr.mxu0 0.0
        %919 = vmatpush1.msra.mxu0 0.0
        %920 = vmatprep.subr.mxu0 0.0
        %921 = vmatpush1.msra.mxu0 0.0
        %922 = vmatprep.subr.mxu0 0.0
        %923 = vmatpush1.msra.mxu0 0.0
        %924 = vmatprep.subr.mxu0 0.0
        %925 = vmatpush1.msra.mxu0 0.0
        %926 = vmatprep.subr.mxu0 0.0
        %927 = vmatpush1.msra.mxu0 0.0
        %928 = vmatprep.subr.mxu0 0.0
        %929 = vmatpush1.msra.mxu0 0.0
        %930 = vmatprep.subr.mxu0 0.0
        %931 = vmatpush1.msra.mxu0 0.0
        %932 = vmatprep.subr.mxu0 0.0
        %933 = vmatpush1.msra.mxu0 0.0
        %934 = vmatprep.subr.mxu0 0.0
        %935 = vmatpush1.msra.mxu0 0.0
        %936 = vmatprep.subr.mxu0 0.0
        %937 = vmatpush1.msra.mxu0 0.0
        %938 = vmatprep.subr.mxu0 0.0
        %939 = vmatpush1.msra.mxu0 0.0
        %940 = vmatprep.subr.mxu0 0.0
        %941 = vmatpush1.msra.mxu0 0.0
        %942 = vmatprep.subr.mxu0 0.0
        %943 = vmatpush1.msra.mxu0 0.0
        %944 = vmatprep.subr.mxu0 0.0
        %945 = vmatpush1.msra.mxu0 0.0
        %946 = vmatprep.subr.mxu0 0.0
        %947 = vmatpush1.msra.mxu0 0.0
        %948 = vmatprep.subr.mxu0 0.0
        %949 = vmatpush1.msra.mxu0 0.0
        %950 = vmatprep.subr.mxu0 0.0
        %951 = vmatpush1.msra.mxu0 0.0
        %952 = vmatprep.subr.mxu0 0.0
        %953 = vmatpush1.msra.mxu0 0.0
        %954 = vmatprep.mubr.f32.mxu0 0.0
        %v955 = vand.u32 %v585, 4294901760
        %956 = vmatmul.mubr.f32.gmra.mrb[0].mxu0 %v955
        %v957 = vpop.f32.mrb[0].mxu0
        %v958 = vadd.f32 %v884, %v957
        %v959 = vpop.f32.mrb[0].mxu0
        %960 = vdwg.mxu0
        %961 = vmatprep.subr.mxu0 0.0
        %v962 = vand.u32 %v560, 4294901760
        %963 = vmatpush1.msra.mxu0 %v962
        %964 = vmatprep.subr.mxu0 0.0
        %965 = vmatpush1.msra.mxu0 0.0
        %966 = vmatprep.subr.mxu0 0.0
        %967 = vmatpush1.msra.mxu0 0.0
        %968 = vmatprep.subr.mxu0 0.0
        %969 = vmatpush1.msra.mxu0 0.0
        %970 = vmatprep.subr.mxu0 0.0
        %971 = vmatpush1.msra.mxu0 0.0
        %972 = vmatprep.subr.mxu0 0.0
        %973 = vmatpush1.msra.mxu0 0.0
        %974 = vmatprep.subr.mxu0 0.0
        %975 = vmatpush1.msra.mxu0 0.0
        %976 = vmatprep.subr.mxu0 0.0
        %977 = vmatpush1.msra.mxu0 0.0
        %978 = vmatprep.subr.mxu0 0.0
        %979 = vmatpush1.msra.mxu0 0.0
        %980 = vmatprep.subr.mxu0 0.0
        %981 = vmatpush1.msra.mxu0 0.0
        %982 = vmatprep.subr.mxu0 0.0
        %983 = vmatpush1.msra.mxu0 0.0
        %984 = vmatprep.subr.mxu0 0.0
        %985 = vmatpush1.msra.mxu0 0.0
        %986 = vmatprep.subr.mxu0 0.0
        %987 = vmatpush1.msra.mxu0 0.0
        %988 = vmatprep.subr.mxu0 0.0
        %989 = vmatpush1.msra.mxu0 0.0
        %990 = vmatprep.subr.mxu0 0.0
        %991 = vmatpush1.msra.mxu0 0.0
        %992 = vmatprep.subr.mxu0 0.0
        %993 = vmatpush1.msra.mxu0 0.0
        %994 = vmatprep.subr.mxu0 0.0
        %995 = vmatpush1.msra.mxu0 0.0
        %996 = vmatprep.subr.mxu0 0.0
        %997 = vmatpush1.msra.mxu0 0.0
        %998 = vmatprep.subr.mxu0 0.0
        %999 = vmatpush1.msra.mxu0 0.0
        %1000 = vmatprep.subr.mxu0 0.0
        %1001 = vmatpush1.msra.mxu0 0.0
        %1002 = vmatprep.subr.mxu0 0.0
        %1003 = vmatpush1.msra.mxu0 0.0
        %1004 = vmatprep.subr.mxu0 0.0
        %1005 = vmatpush1.msra.mxu0 0.0
        %1006 = vmatprep.subr.mxu0 0.0
        %1007 = vmatpush1.msra.mxu0 0.0
        %1008 = vmatprep.subr.mxu0 0.0
        %1009 = vmatpush1.msra.mxu0 0.0
        %1010 = vmatprep.subr.mxu0 0.0
        %1011 = vmatpush1.msra.mxu0 0.0
        %1012 = vmatprep.subr.mxu0 0.0
        %1013 = vmatpush1.msra.mxu0 0.0
        %1014 = vmatprep.subr.mxu0 0.0
        %1015 = vmatpush1.msra.mxu0 0.0
        %1016 = vmatprep.subr.mxu0 0.0
        %1017 = vmatpush1.msra.mxu0 0.0
        %1018 = vmatprep.subr.mxu0 0.0
        %1019 = vmatpush1.msra.mxu0 0.0
        %1020 = vmatprep.subr.mxu0 0.0
        %1021 = vmatpush1.msra.mxu0 0.0
        %1022 = vmatprep.subr.mxu0 0.0
        %1023 = vmatpush1.msra.mxu0 0.0
        %1024 = vmatprep.subr.mxu0 0.0
        %1025 = vmatpush1.msra.mxu0 0.0
        %1026 = vmatprep.mubr.f32.mxu0 0.0
        %v1027 = vand.u32 %v585, 4294901760
        %1028 = vmatmul.mubr.f32.gmra.mrb[0].mxu0 %v1027
        %v1029 = vpop.f32.mrb[0].mxu0
        %v1030 = vadd.f32 %v958, %v1029
        %v1031 = vpop.f32.mrb[0].mxu0
        %1032 = vdwg.mxu0
        %v1033 = vmax.f32 %v1030, 0.0
        %v1034 = vld [vmem:[%s4] sm:$0xff]
        %v1035 = vld [vmem:[%s5] sm:$0x1]
        %v1037 = vlaneseq
        %v1038 = vshrl.u32 %v1037, 7
        %v1039 = vsub.s32 0, %v1038
        %v1040 = vrot.slane %v1035, %v1039
        %v1043 = vsel %vm483, %v1033, 0
        %1045 = vmatprep.subr.mxu0 0.0
        %v1046 = vand.u32 %v1034, 4294901760
        %1047 = vmatpush1.msra.mxu0 %v1046
        %1048 = vmatprep.subr.mxu0 0.0
        %1049 = vmatpush1.msra.mxu0 0.0
        %1050 = vmatprep.subr.mxu0 0.0
        %1051 = vmatpush1.msra.mxu0 0.0
        %1052 = vmatprep.subr.mxu0 0.0
        %1053 = vmatpush1.msra.mxu0 0.0
        %1054 = vmatprep.subr.mxu0 0.0
        %1055 = vmatpush1.msra.mxu0 0.0
        %1056 = vmatprep.subr.mxu0 0.0
        %1057 = vmatpush1.msra.mxu0 0.0
        %1058 = vmatprep.subr.mxu0 0.0
        %1059 = vmatpush1.msra.mxu0 0.0
        %1060 = vmatprep.subr.mxu0 0.0
        %1061 = vmatpush1.msra.mxu0 0.0
        %1062 = vmatprep.subr.mxu0 0.0
        %1063 = vmatpush1.msra.mxu0 0.0
        %1064 = vmatprep.subr.mxu0 0.0
        %1065 = vmatpush1.msra.mxu0 0.0
        %1066 = vmatprep.subr.mxu0 0.0
        %1067 = vmatpush1.msra.mxu0 0.0
        %1068 = vmatprep.subr.mxu0 0.0
        %1069 = vmatpush1.msra.mxu0 0.0
        %1070 = vmatprep.subr.mxu0 0.0
        %1071 = vmatpush1.msra.mxu0 0.0
        %1072 = vmatprep.subr.mxu0 0.0
        %1073 = vmatpush1.msra.mxu0 0.0
        %1074 = vmatprep.subr.mxu0 0.0
        %1075 = vmatpush1.msra.mxu0 0.0
        %1076 = vmatprep.subr.mxu0 0.0
        %1077 = vmatpush1.msra.mxu0 0.0
        %1078 = vmatprep.subr.mxu0 0.0
        %1079 = vmatpush1.msra.mxu0 0.0
        %1080 = vmatprep.subr.mxu0 0.0
        %1081 = vmatpush1.msra.mxu0 0.0
        %1082 = vmatprep.subr.mxu0 0.0
        %1083 = vmatpush1.msra.mxu0 0.0
        %1084 = vmatprep.subr.mxu0 0.0
        %1085 = vmatpush1.msra.mxu0 0.0
        %1086 = vmatprep.subr.mxu0 0.0
        %1087 = vmatpush1.msra.mxu0 0.0
        %1088 = vmatprep.subr.mxu0 0.0
        %1089 = vmatpush1.msra.mxu0 0.0
        %1090 = vmatprep.subr.mxu0 0.0
        %1091 = vmatpush1.msra.mxu0 0.0
        %1092 = vmatprep.subr.mxu0 0.0
        %1093 = vmatpush1.msra.mxu0 0.0
        %1094 = vmatprep.subr.mxu0 0.0
        %1095 = vmatpush1.msra.mxu0 0.0
        %1096 = vmatprep.subr.mxu0 0.0
        %1097 = vmatpush1.msra.mxu0 0.0
        %1098 = vmatprep.subr.mxu0 0.0
        %1099 = vmatpush1.msra.mxu0 0.0
        %1100 = vmatprep.subr.mxu0 0.0
        %1101 = vmatpush1.msra.mxu0 0.0
        %1102 = vmatprep.subr.mxu0 0.0
        %1103 = vmatpush1.msra.mxu0 0.0
        %1104 = vmatprep.subr.mxu0 0.0
        %1105 = vmatpush1.msra.mxu0 0.0
        %1106 = vmatprep.subr.mxu0 0.0
        %1107 = vmatpush1.msra.mxu0 0.0
        %1108 = vmatprep.subr.mxu0 0.0
        %1109 = vmatpush1.msra.mxu0 0.0
        %1110 = vmatprep.mubr.f32.mxu0 0.0
        %v1111 = vand.u32 %v1043, 4294901760
        %v1112 = vsub.f32 %v1043, %v1111
        %v1113 = vand.u32 %v1112, 4294901760
        %v1114 = vsub.f32 %v1112, %v1113
        %v1115 = vand.u32 %v1114, 4294901760
        %1116 = vmatmul.mubr.f32.gmra.mrb[0].mxu0 %v1115
        %v1117 = vpop.f32.mrb[0].mxu0
        %v1118 = vadd.f32 %v1040, %v1117
        %v1119 = vpop.f32.mrb[0].mxu0
        %1120 = vdwg.mxu0
        %1121 = vmatprep.subr.mxu0 0.0
        %v1122 = vand.u32 %v1034, 4294901760
        %v1123 = vsub.f32 %v1034, %v1122
        %v1124 = vand.u32 %v1123, 4294901760
        %v1125 = vsub.f32 %v1123, %v1124
        %v1126 = vand.u32 %v1125, 4294901760
        %1127 = vmatpush1.msra.mxu0 %v1126
        %1128 = vmatprep.subr.mxu0 0.0
        %1129 = vmatpush1.msra.mxu0 0.0
        %1130 = vmatprep.subr.mxu0 0.0
        %1131 = vmatpush1.msra.mxu0 0.0
        %1132 = vmatprep.subr.mxu0 0.0
        %1133 = vmatpush1.msra.mxu0 0.0
        %1134 = vmatprep.subr.mxu0 0.0
        %1135 = vmatpush1.msra.mxu0 0.0
        %1136 = vmatprep.subr.mxu0 0.0
        %1137 = vmatpush1.msra.mxu0 0.0
        %1138 = vmatprep.subr.mxu0 0.0
        %1139 = vmatpush1.msra.mxu0 0.0
        %1140 = vmatprep.subr.mxu0 0.0
        %1141 = vmatpush1.msra.mxu0 0.0
        %1142 = vmatprep.subr.mxu0 0.0
        %1143 = vmatpush1.msra.mxu0 0.0
        %1144 = vmatprep.subr.mxu0 0.0
        %1145 = vmatpush1.msra.mxu0 0.0
        %1146 = vmatprep.subr.mxu0 0.0
        %1147 = vmatpush1.msra.mxu0 0.0
        %1148 = vmatprep.subr.mxu0 0.0
        %1149 = vmatpush1.msra.mxu0 0.0
        %1150 = vmatprep.subr.mxu0 0.0
        %1151 = vmatpush1.msra.mxu0 0.0
        %1152 = vmatprep.subr.mxu0 0.0
        %1153 = vmatpush1.msra.mxu0 0.0
        %1154 = vmatprep.subr.mxu0 0.0
        %1155 = vmatpush1.msra.mxu0 0.0
        %1156 = vmatprep.subr.mxu0 0.0
        %1157 = vmatpush1.msra.mxu0 0.0
        %1158 = vmatprep.subr.mxu0 0.0
        %1159 = vmatpush1.msra.mxu0 0.0
        %1160 = vmatprep.subr.mxu0 0.0
        %1161 = vmatpush1.msra.mxu0 0.0
        %1162 = vmatprep.subr.mxu0 0.0
        %1163 = vmatpush1.msra.mxu0 0.0
        %1164 = vmatprep.subr.mxu0 0.0
        %1165 = vmatpush1.msra.mxu0 0.0
        %1166 = vmatprep.subr.mxu0 0.0
        %1167 = vmatpush1.msra.mxu0 0.0
        %1168 = vmatprep.subr.mxu0 0.0
        %1169 = vmatpush1.msra.mxu0 0.0
        %1170 = vmatprep.subr.mxu0 0.0
        %1171 = vmatpush1.msra.mxu0 0.0
        %1172 = vmatprep.subr.mxu0 0.0
        %1173 = vmatpush1.msra.mxu0 0.0
        %1174 = vmatprep.subr.mxu0 0.0
        %1175 = vmatpush1.msra.mxu0 0.0
        %1176 = vmatprep.subr.mxu0 0.0
        %1177 = vmatpush1.msra.mxu0 0.0
        %1178 = vmatprep.subr.mxu0 0.0
        %1179 = vmatpush1.msra.mxu0 0.0
        %1180 = vmatprep.subr.mxu0 0.0
        %1181 = vmatpush1.msra.mxu0 0.0
        %1182 = vmatprep.subr.mxu0 0.0
        %1183 = vmatpush1.msra.mxu0 0.0
        %1184 = vmatprep.subr.mxu0 0.0
        %1185 = vmatpush1.msra.mxu0 0.0
        %1186 = vmatprep.subr.mxu0 0.0
        %1187 = vmatpush1.msra.mxu0 0.0
        %1188 = vmatprep.subr.mxu0 0.0
        %1189 = vmatpush1.msra.mxu0 0.0
        %1190 = vmatprep.mubr.f32.mxu0 0.0
        %v1191 = vand.u32 %v1043, 4294901760
        %1192 = vmatmul.mubr.f32.gmra.mrb[0].mxu0 %v1191
        %v1193 = vpop.f32.mrb[0].mxu0
        %v1194 = vadd.f32 %v1118, %v1193
        %v1195 = vpop.f32.mrb[0].mxu0
        %1196 = vdwg.mxu0
        %1197 = vmatprep.subr.mxu0 0.0
        %v1198 = vand.u32 %v1034, 4294901760
        %v1199 = vsub.f32 %v1034, %v1198
        %1200 = vmatpush1.msra.mxu0 %v1199
        %1201 = vmatprep.subr.mxu0 0.0
        %1202 = vmatpush1.msra.mxu0 0.0
        %1203 = vmatprep.subr.mxu0 0.0
        %1204 = vmatpush1.msra.mxu0 0.0
        %1205 = vmatprep.subr.mxu0 0.0
        %1206 = vmatpush1.msra.mxu0 0.0
        %1207 = vmatprep.subr.mxu0 0.0
        %1208 = vmatpush1.msra.mxu0 0.0
        %1209 = vmatprep.subr.mxu0 0.0
        %1210 = vmatpush1.msra.mxu0 0.0
        %1211 = vmatprep.subr.mxu0 0.0
        %1212 = vmatpush1.msra.mxu0 0.0
        %1213 = vmatprep.subr.mxu0 0.0
        %1214 = vmatpush1.msra.mxu0 0.0
        %1215 = vmatprep.subr.mxu0 0.0
        %1216 = vmatpush1.msra.mxu0 0.0
        %1217 = vmatprep.subr.mxu0 0.0
        %1218 = vmatpush1.msra.mxu0 0.0
        %1219 = vmatprep.subr.mxu0 0.0
        %1220 = vmatpush1.msra.mxu0 0.0
        %1221 = vmatprep.subr.mxu0 0.0
        %1222 = vmatpush1.msra.mxu0 0.0
        %1223 = vmatprep.subr.mxu0 0.0
        %1224 = vmatpush1.msra.mxu0 0.0
        %1225 = vmatprep.subr.mxu0 0.0
        %1226 = vmatpush1.msra.mxu0 0.0
        %1227 = vmatprep.subr.mxu0 0.0
        %1228 = vmatpush1.msra.mxu0 0.0
        %1229 = vmatprep.subr.mxu0 0.0
        %1230 = vmatpush1.msra.mxu0 0.0
        %1231 = vmatprep.subr.mxu0 0.0
        %1232 = vmatpush1.msra.mxu0 0.0
        %1233 = vmatprep.subr.mxu0 0.0
        %1234 = vmatpush1.msra.mxu0 0.0
        %1235 = vmatprep.subr.mxu0 0.0
        %1236 = vmatpush1.msra.mxu0 0.0
        %1237 = vmatprep.subr.mxu0 0.0
        %1238 = vmatpush1.msra.mxu0 0.0
        %1239 = vmatprep.subr.mxu0 0.0
        %1240 = vmatpush1.msra.mxu0 0.0
        %1241 = vmatprep.subr.mxu0 0.0
        %1242 = vmatpush1.msra.mxu0 0.0
        %1243 = vmatprep.subr.mxu0 0.0
        %1244 = vmatpush1.msra.mxu0 0.0
        %1245 = vmatprep.subr.mxu0 0.0
        %1246 = vmatpush1.msra.mxu0 0.0
        %1247 = vmatprep.subr.mxu0 0.0
        %1248 = vmatpush1.msra.mxu0 0.0
        %1249 = vmatprep.subr.mxu0 0.0
        %1250 = vmatpush1.msra.mxu0 0.0
        %1251 = vmatprep.subr.mxu0 0.0
        %1252 = vmatpush1.msra.mxu0 0.0
        %1253 = vmatprep.subr.mxu0 0.0
        %1254 = vmatpush1.msra.mxu0 0.0
        %1255 = vmatprep.subr.mxu0 0.0
        %1256 = vmatpush1.msra.mxu0 0.0
        %1257 = vmatprep.subr.mxu0 0.0
        %1258 = vmatpush1.msra.mxu0 0.0
        %1259 = vmatprep.subr.mxu0 0.0
        %1260 = vmatpush1.msra.mxu0 0.0
        %1261 = vmatprep.subr.mxu0 0.0
        %1262 = vmatpush1.msra.mxu0 0.0
        %1263 = vmatprep.mubr.f32.mxu0 0.0
        %v1264 = vand.u32 %v1043, 4294901760
        %v1265 = vsub.f32 %v1043, %v1264
        %1266 = vmatmul.mubr.f32.gmra.mrb[0].mxu0 %v1265
        %v1267 = vpop.f32.mrb[0].mxu0
        %v1268 = vadd.f32 %v1194, %v1267
        %v1269 = vpop.f32.mrb[0].mxu0
        %1270 = vdwg.mxu0
        %1271 = vmatprep.subr.mxu0 0.0
        %v1272 = vand.u32 %v1034, 4294901760
        %1273 = vmatpush1.msra.mxu0 %v1272
        %1274 = vmatprep.subr.mxu0 0.0
        %1275 = vmatpush1.msra.mxu0 0.0
        %1276 = vmatprep.subr.mxu0 0.0
        %1277 = vmatpush1.msra.mxu0 0.0
        %1278 = vmatprep.subr.mxu0 0.0
        %1279 = vmatpush1.msra.mxu0 0.0
        %1280 = vmatprep.subr.mxu0 0.0
        %1281 = vmatpush1.msra.mxu0 0.0
        %1282 = vmatprep.subr.mxu0 0.0
        %1283 = vmatpush1.msra.mxu0 0.0
        %1284 = vmatprep.subr.mxu0 0.0
        %1285 = vmatpush1.msra.mxu0 0.0
        %1286 = vmatprep.subr.mxu0 0.0
        %1287 = vmatpush1.msra.mxu0 0.0
        %1288 = vmatprep.subr.mxu0 0.0
        %1289 = vmatpush1.msra.mxu0 0.0
        %1290 = vmatprep.subr.mxu0 0.0
        %1291 = vmatpush1.msra.mxu0 0.0
        %1292 = vmatprep.subr.mxu0 0.0
        %1293 = vmatpush1.msra.mxu0 0.0
        %1294 = vmatprep.subr.mxu0 0.0
        %1295 = vmatpush1.msra.mxu0 0.0
        %1296 = vmatprep.subr.mxu0 0.0
        %1297 = vmatpush1.msra.mxu0 0.0
        %1298 = vmatprep.subr.mxu0 0.0
        %1299 = vmatpush1.msra.mxu0 0.0
        %1300 = vmatprep.subr.mxu0 0.0
        %1301 = vmatpush1.msra.mxu0 0.0
        %1302 = vmatprep.subr.mxu0 0.0
        %1303 = vmatpush1.msra.mxu0 0.0
        %1304 = vmatprep.subr.mxu0 0.0
        %1305 = vmatpush1.msra.mxu0 0.0
        %1306 = vmatprep.subr.mxu0 0.0
        %1307 = vmatpush1.msra.mxu0 0.0
        %1308 = vmatprep.subr.mxu0 0.0
        %1309 = vmatpush1.msra.mxu0 0.0
        %1310 = vmatprep.subr.mxu0 0.0
        %1311 = vmatpush1.msra.mxu0 0.0
        %1312 = vmatprep.subr.mxu0 0.0
        %1313 = vmatpush1.msra.mxu0 0.0
        %1314 = vmatprep.subr.mxu0 0.0
        %1315 = vmatpush1.msra.mxu0 0.0
        %1316 = vmatprep.subr.mxu0 0.0
        %1317 = vmatpush1.msra.mxu0 0.0
        %1318 = vmatprep.subr.mxu0 0.0
        %1319 = vmatpush1.msra.mxu0 0.0
        %1320 = vmatprep.subr.mxu0 0.0
        %1321 = vmatpush1.msra.mxu0 0.0
        %1322 = vmatprep.subr.mxu0 0.0
        %1323 = vmatpush1.msra.mxu0 0.0
        %1324 = vmatprep.subr.mxu0 0.0
        %1325 = vmatpush1.msra.mxu0 0.0
        %1326 = vmatprep.subr.mxu0 0.0
        %1327 = vmatpush1.msra.mxu0 0.0
        %1328 = vmatprep.subr.mxu0 0.0
        %1329 = vmatpush1.msra.mxu0 0.0
        %1330 = vmatprep.subr.mxu0 0.0
        %1331 = vmatpush1.msra.mxu0 0.0
        %1332 = vmatprep.subr.mxu0 0.0
        %1333 = vmatpush1.msra.mxu0 0.0
        %1334 = vmatprep.subr.mxu0 0.0
        %1335 = vmatpush1.msra.mxu0 0.0
        %1336 = vmatprep.mubr.f32.mxu0 0.0
        %v1337 = vand.u32 %v1043, 4294901760
        %v1338 = vsub.f32 %v1043, %v1337
        %v1339 = vand.u32 %v1338, 4294901760
        %1340 = vmatmul.mubr.f32.gmra.mrb[0].mxu0 %v1339
        %v1341 = vpop.f32.mrb[0].mxu0
        %v1342 = vadd.f32 %v1268, %v1341
        %v1343 = vpop.f32.mrb[0].mxu0
        %1344 = vdwg.mxu0
        %1345 = vmatprep.subr.mxu0 0.0
        %v1346 = vand.u32 %v1034, 4294901760
        %v1347 = vsub.f32 %v1034, %v1346
        %v1348 = vand.u32 %v1347, 4294901760
        %1349 = vmatpush1.msra.mxu0 %v1348
        %1350 = vmatprep.subr.mxu0 0.0
        %1351 = vmatpush1.msra.mxu0 0.0
        %1352 = vmatprep.subr.mxu0 0.0
        %1353 = vmatpush1.msra.mxu0 0.0
        %1354 = vmatprep.subr.mxu0 0.0
        %1355 = vmatpush1.msra.mxu0 0.0
        %1356 = vmatprep.subr.mxu0 0.0
        %1357 = vmatpush1.msra.mxu0 0.0
        %1358 = vmatprep.subr.mxu0 0.0
        %1359 = vmatpush1.msra.mxu0 0.0
        %1360 = vmatprep.subr.mxu0 0.0
        %1361 = vmatpush1.msra.mxu0 0.0
        %1362 = vmatprep.subr.mxu0 0.0
        %1363 = vmatpush1.msra.mxu0 0.0
        %1364 = vmatprep.subr.mxu0 0.0
        %1365 = vmatpush1.msra.mxu0 0.0
        %1366 = vmatprep.subr.mxu0 0.0
        %1367 = vmatpush1.msra.mxu0 0.0
        %1368 = vmatprep.subr.mxu0 0.0
        %1369 = vmatpush1.msra.mxu0 0.0
        %1370 = vmatprep.subr.mxu0 0.0
        %1371 = vmatpush1.msra.mxu0 0.0
        %1372 = vmatprep.subr.mxu0 0.0
        %1373 = vmatpush1.msra.mxu0 0.0
        %1374 = vmatprep.subr.mxu0 0.0
        %1375 = vmatpush1.msra.mxu0 0.0
        %1376 = vmatprep.subr.mxu0 0.0
        %1377 = vmatpush1.msra.mxu0 0.0
        %1378 = vmatprep.subr.mxu0 0.0
        %1379 = vmatpush1.msra.mxu0 0.0
        %1380 = vmatprep.subr.mxu0 0.0
        %1381 = vmatpush1.msra.mxu0 0.0
        %1382 = vmatprep.subr.mxu0 0.0
        %1383 = vmatpush1.msra.mxu0 0.0
        %1384 = vmatprep.subr.mxu0 0.0
        %1385 = vmatpush1.msra.mxu0 0.0
        %1386 = vmatprep.subr.mxu0 0.0
        %1387 = vmatpush1.msra.mxu0 0.0
        %1388 = vmatprep.subr.mxu0 0.0
        %1389 = vmatpush1.msra.mxu0 0.0
        %1390 = vmatprep.subr.mxu0 0.0
        %1391 = vmatpush1.msra.mxu0 0.0
        %1392 = vmatprep.subr.mxu0 0.0
        %1393 = vmatpush1.msra.mxu0 0.0
        %1394 = vmatprep.subr.mxu0 0.0
        %1395 = vmatpush1.msra.mxu0 0.0
        %1396 = vmatprep.subr.mxu0 0.0
        %1397 = vmatpush1.msra.mxu0 0.0
        %1398 = vmatprep.subr.mxu0 0.0
        %1399 = vmatpush1.msra.mxu0 0.0
        %1400 = vmatprep.subr.mxu0 0.0
        %1401 = vmatpush1.msra.mxu0 0.0
        %1402 = vmatprep.subr.mxu0 0.0
        %1403 = vmatpush1.msra.mxu0 0.0
        %1404 = vmatprep.subr.mxu0 0.0
        %1405 = vmatpush1.msra.mxu0 0.0
        %1406 = vmatprep.subr.mxu0 0.0
        %1407 = vmatpush1.msra.mxu0 0.0
        %1408 = vmatprep.subr.mxu0 0.0
        %1409 = vmatpush1.msra.mxu0 0.0
        %1410 = vmatprep.subr.mxu0 0.0
        %1411 = vmatpush1.msra.mxu0 0.0
        %1412 = vmatprep.mubr.f32.mxu0 0.0
        %v1413 = vand.u32 %v1043, 4294901760
        %1414 = vmatmul.mubr.f32.gmra.mrb[0].mxu0 %v1413
        %v1415 = vpop.f32.mrb[0].mxu0
        %v1416 = vadd.f32 %v1342, %v1415
        %v1417 = vpop.f32.mrb[0].mxu0
        %1418 = vdwg.mxu0
        %1419 = vmatprep.subr.mxu0 0.0
        %v1420 = vand.u32 %v1034, 4294901760
        %1421 = vmatpush1.msra.mxu0 %v1420
        %1422 = vmatprep.subr.mxu0 0.0
        %1423 = vmatpush1.msra.mxu0 0.0
        %1424 = vmatprep.subr.mxu0 0.0
        %1425 = vmatpush1.msra.mxu0 0.0
        %1426 = vmatprep.subr.mxu0 0.0
        %1427 = vmatpush1.msra.mxu0 0.0
        %1428 = vmatprep.subr.mxu0 0.0
        %1429 = vmatpush1.msra.mxu0 0.0
        %1430 = vmatprep.subr.mxu0 0.0
        %1431 = vmatpush1.msra.mxu0 0.0
        %1432 = vmatprep.subr.mxu0 0.0
        %1433 = vmatpush1.msra.mxu0 0.0
        %1434 = vmatprep.subr.mxu0 0.0
        %1435 = vmatpush1.msra.mxu0 0.0
        %1436 = vmatprep.subr.mxu0 0.0
        %1437 = vmatpush1.msra.mxu0 0.0
        %1438 = vmatprep.subr.mxu0 0.0
        %1439 = vmatpush1.msra.mxu0 0.0
        %1440 = vmatprep.subr.mxu0 0.0
        %1441 = vmatpush1.msra.mxu0 0.0
        %1442 = vmatprep.subr.mxu0 0.0
        %1443 = vmatpush1.msra.mxu0 0.0
        %1444 = vmatprep.subr.mxu0 0.0
        %1445 = vmatpush1.msra.mxu0 0.0
        %1446 = vmatprep.subr.mxu0 0.0
        %1447 = vmatpush1.msra.mxu0 0.0
        %1448 = vmatprep.subr.mxu0 0.0
        %1449 = vmatpush1.msra.mxu0 0.0
        %1450 = vmatprep.subr.mxu0 0.0
        %1451 = vmatpush1.msra.mxu0 0.0
        %1452 = vmatprep.subr.mxu0 0.0
        %1453 = vmatpush1.msra.mxu0 0.0
        %1454 = vmatprep.subr.mxu0 0.0
        %1455 = vmatpush1.msra.mxu0 0.0
        %1456 = vmatprep.subr.mxu0 0.0
        %1457 = vmatpush1.msra.mxu0 0.0
        %1458 = vmatprep.subr.mxu0 0.0
        %1459 = vmatpush1.msra.mxu0 0.0
        %1460 = vmatprep.subr.mxu0 0.0
        %1461 = vmatpush1.msra.mxu0 0.0
        %1462 = vmatprep.subr.mxu0 0.0
        %1463 = vmatpush1.msra.mxu0 0.0
        %1464 = vmatprep.subr.mxu0 0.0
        %1465 = vmatpush1.msra.mxu0 0.0
        %1466 = vmatprep.subr.mxu0 0.0
        %1467 = vmatpush1.msra.mxu0 0.0
        %1468 = vmatprep.subr.mxu0 0.0
        %1469 = vmatpush1.msra.mxu0 0.0
        %1470 = vmatprep.subr.mxu0 0.0
        %1471 = vmatpush1.msra.mxu0 0.0
        %1472 = vmatprep.subr.mxu0 0.0
        %1473 = vmatpush1.msra.mxu0 0.0
        %1474 = vmatprep.subr.mxu0 0.0
        %1475 = vmatpush1.msra.mxu0 0.0
        %1476 = vmatprep.subr.mxu0 0.0
        %1477 = vmatpush1.msra.mxu0 0.0
        %1478 = vmatprep.subr.mxu0 0.0
        %1479 = vmatpush1.msra.mxu0 0.0
        %1480 = vmatprep.subr.mxu0 0.0
        %1481 = vmatpush1.msra.mxu0 0.0
        %1482 = vmatprep.subr.mxu0 0.0
        %1483 = vmatpush1.msra.mxu0 0.0
        %1484 = vmatprep.mubr.f32.mxu0 0.0
        %v1485 = vand.u32 %v1043, 4294901760
        %1486 = vmatmul.mubr.f32.gmra.mrb[0].mxu0 %v1485
        %v1487 = vpop.f32.mrb[0].mxu0
        %v1488 = vadd.f32 %v1416, %v1487
        %v1489 = vpop.f32.mrb[0].mxu0
        %1490 = vdwg.mxu0
        %v1491 = vmax.f32 %v1488, 0.0
        %v1492 = vld [vmem:[%s403] sm:$0xff]
        %v1493 = vld [vmem:[%s450] sm:$0x1]
        %v1495 = vlaneseq
        %v1496 = vshrl.u32 %v1495, 7
        %v1497 = vsub.s32 0, %v1496
        %v1498 = vrot.slane %v1493, %v1497
        %v1501 = vsel %vm483, %v1491, 0
        %1503 = vmatprep.subr.mxu0 0.0
        %v1504 = vand.u32 %v1492, 4294901760
        %1505 = vmatpush1.msra.mxu0 %v1504
        %1506 = vmatprep.subr.mxu0 0.0
        %1507 = vmatpush1.msra.mxu0 0.0
        %1508 = vmatprep.subr.mxu0 0.0
        %1509 = vmatpush1.msra.mxu0 0.0
        %1510 = vmatprep.subr.mxu0 0.0
        %1511 = vmatpush1.msra.mxu0 0.0
        %1512 = vmatprep.subr.mxu0 0.0
        %1513 = vmatpush1.msra.mxu0 0.0
        %1514 = vmatprep.subr.mxu0 0.0
        %1515 = vmatpush1.msra.mxu0 0.0
        %1516 = vmatprep.subr.mxu0 0.0
        %1517 = vmatpush1.msra.mxu0 0.0
        %1518 = vmatprep.subr.mxu0 0.0
        %1519 = vmatpush1.msra.mxu0 0.0
        %1520 = vmatprep.subr.mxu0 0.0
        %1521 = vmatpush1.msra.mxu0 0.0
        %1522 = vmatprep.subr.mxu0 0.0
        %1523 = vmatpush1.msra.mxu0 0.0
        %1524 = vmatprep.subr.mxu0 0.0
        %1525 = vmatpush1.msra.mxu0 0.0
        %1526 = vmatprep.subr.mxu0 0.0
        %1527 = vmatpush1.msra.mxu0 0.0
        %1528 = vmatprep.subr.mxu0 0.0
        %1529 = vmatpush1.msra.mxu0 0.0
        %1530 = vmatprep.subr.mxu0 0.0
        %1531 = vmatpush1.msra.mxu0 0.0
        %1532 = vmatprep.subr.mxu0 0.0
        %1533 = vmatpush1.msra.mxu0 0.0
        %1534 = vmatprep.subr.mxu0 0.0
        %1535 = vmatpush1.msra.mxu0 0.0
        %1536 = vmatprep.subr.mxu0 0.0
        %1537 = vmatpush1.msra.mxu0 0.0
        %1538 = vmatprep.subr.mxu0 0.0
        %1539 = vmatpush1.msra.mxu0 0.0
        %1540 = vmatprep.subr.mxu0 0.0
        %1541 = vmatpush1.msra.mxu0 0.0
        %1542 = vmatprep.subr.mxu0 0.0
        %1543 = vmatpush1.msra.mxu0 0.0
        %1544 = vmatprep.subr.mxu0 0.0
        %1545 = vmatpush1.msra.mxu0 0.0
        %1546 = vmatprep.subr.mxu0 0.0
        %1547 = vmatpush1.msra.mxu0 0.0
        %1548 = vmatprep.subr.mxu0 0.0
        %1549 = vmatpush1.msra.mxu0 0.0
        %1550 = vmatprep.subr.mxu0 0.0
        %1551 = vmatpush1.msra.mxu0 0.0
        %1552 = vmatprep.subr.mxu0 0.0
        %1553 = vmatpush1.msra.mxu0 0.0
        %1554 = vmatprep.subr.mxu0 0.0
        %1555 = vmatpush1.msra.mxu0 0.0
        %1556 = vmatprep.subr.mxu0 0.0
        %1557 = vmatpush1.msra.mxu0 0.0
        %1558 = vmatprep.subr.mxu0 0.0
        %1559 = vmatpush1.msra.mxu0 0.0
        %1560 = vmatprep.subr.mxu0 0.0
        %1561 = vmatpush1.msra.mxu0 0.0
        %1562 = vmatprep.subr.mxu0 0.0
        %1563 = vmatpush1.msra.mxu0 0.0
        %1564 = vmatprep.subr.mxu0 0.0
        %1565 = vmatpush1.msra.mxu0 0.0
        %1566 = vmatprep.subr.mxu0 0.0
        %1567 = vmatpush1.msra.mxu0 0.0
        %1568 = vmatprep.mubr.f32.mxu0 0.0
        %v1569 = vand.u32 %v1501, 4294901760
        %v1570 = vsub.f32 %v1501, %v1569
        %v1571 = vand.u32 %v1570, 4294901760
        %v1572 = vsub.f32 %v1570, %v1571
        %v1573 = vand.u32 %v1572, 4294901760
        %1574 = vmatmul.mubr.f32.gmra.mrb[0].mxu0 %v1573
        %v1575 = vpop.f32.mrb[0].mxu0
        %v1576 = vadd.f32 %v1498, %v1575
        %v1577 = vpop.f32.mrb[0].mxu0
        %1578 = vdwg.mxu0
        %1579 = vmatprep.subr.mxu0 0.0
        %v1580 = vand.u32 %v1492, 4294901760
        %v1581 = vsub.f32 %v1492, %v1580
        %v1582 = vand.u32 %v1581, 4294901760
        %v1583 = vsub.f32 %v1581, %v1582
        %v1584 = vand.u32 %v1583, 4294901760
        %1585 = vmatpush1.msra.mxu0 %v1584
        %1586 = vmatprep.subr.mxu0 0.0
        %1587 = vmatpush1.msra.mxu0 0.0
        %1588 = vmatprep.subr.mxu0 0.0
        %1589 = vmatpush1.msra.mxu0 0.0
        %1590 = vmatprep.subr.mxu0 0.0
        %1591 = vmatpush1.msra.mxu0 0.0
        %1592 = vmatprep.subr.mxu0 0.0
        %1593 = vmatpush1.msra.mxu0 0.0
        %1594 = vmatprep.subr.mxu0 0.0
        %1595 = vmatpush1.msra.mxu0 0.0
        %1596 = vmatprep.subr.mxu0 0.0
        %1597 = vmatpush1.msra.mxu0 0.0
        %1598 = vmatprep.subr.mxu0 0.0
        %1599 = vmatpush1.msra.mxu0 0.0
        %1600 = vmatprep.subr.mxu0 0.0
        %1601 = vmatpush1.msra.mxu0 0.0
        %1602 = vmatprep.subr.mxu0 0.0
        %1603 = vmatpush1.msra.mxu0 0.0
        %1604 = vmatprep.subr.mxu0 0.0
        %1605 = vmatpush1.msra.mxu0 0.0
        %1606 = vmatprep.subr.mxu0 0.0
        %1607 = vmatpush1.msra.mxu0 0.0
        %1608 = vmatprep.subr.mxu0 0.0
        %1609 = vmatpush1.msra.mxu0 0.0
        %1610 = vmatprep.subr.mxu0 0.0
        %1611 = vmatpush1.msra.mxu0 0.0
        %1612 = vmatprep.subr.mxu0 0.0
        %1613 = vmatpush1.msra.mxu0 0.0
        %1614 = vmatprep.subr.mxu0 0.0
        %1615 = vmatpush1.msra.mxu0 0.0
        %1616 = vmatprep.subr.mxu0 0.0
        %1617 = vmatpush1.msra.mxu0 0.0
        %1618 = vmatprep.subr.mxu0 0.0
        %1619 = vmatpush1.msra.mxu0 0.0
        %1620 = vmatprep.subr.mxu0 0.0
        %1621 = vmatpush1.msra.mxu0 0.0
        %1622 = vmatprep.subr.mxu0 0.0
        %1623 = vmatpush1.msra.mxu0 0.0
        %1624 = vmatprep.subr.mxu0 0.0
        %1625 = vmatpush1.msra.mxu0 0.0
        %1626 = vmatprep.subr.mxu0 0.0
        %1627 = vmatpush1.msra.mxu0 0.0
        %1628 = vmatprep.subr.mxu0 0.0
        %1629 = vmatpush1.msra.mxu0 0.0
        %1630 = vmatprep.subr.mxu0 0.0
        %1631 = vmatpush1.msra.mxu0 0.0
        %1632 = vmatprep.subr.mxu0 0.0
        %1633 = vmatpush1.msra.mxu0 0.0
        %1634 = vmatprep.subr.mxu0 0.0
        %1635 = vmatpush1.msra.mxu0 0.0
        %1636 = vmatprep.subr.mxu0 0.0
        %1637 = vmatpush1.msra.mxu0 0.0
        %1638 = vmatprep.subr.mxu0 0.0
        %1639 = vmatpush1.msra.mxu0 0.0
        %1640 = vmatprep.subr.mxu0 0.0
        %1641 = vmatpush1.msra.mxu0 0.0
        %1642 = vmatprep.subr.mxu0 0.0
        %1643 = vmatpush1.msra.mxu0 0.0
        %1644 = vmatprep.subr.mxu0 0.0
        %1645 = vmatpush1.msra.mxu0 0.0
        %1646 = vmatprep.subr.mxu0 0.0
        %1647 = vmatpush1.msra.mxu0 0.0
        %1648 = vmatprep.mubr.f32.mxu0 0.0
        %v1649 = vand.u32 %v1501, 4294901760
        %1650 = vmatmul.mubr.f32.gmra.mrb[0].mxu0 %v1649
        %v1651 = vpop.f32.mrb[0].mxu0
        %v1652 = vadd.f32 %v1576, %v1651
        %v1653 = vpop.f32.mrb[0].mxu0
        %1654 = vdwg.mxu0
        %1655 = vmatprep.subr.mxu0 0.0
        %v1656 = vand.u32 %v1492, 4294901760
        %v1657 = vsub.f32 %v1492, %v1656
        %1658 = vmatpush1.msra.mxu0 %v1657
        %1659 = vmatprep.subr.mxu0 0.0
        %1660 = vmatpush1.msra.mxu0 0.0
        %1661 = vmatprep.subr.mxu0 0.0
        %1662 = vmatpush1.msra.mxu0 0.0
        %1663 = vmatprep.subr.mxu0 0.0
        %1664 = vmatpush1.msra.mxu0 0.0
        %1665 = vmatprep.subr.mxu0 0.0
        %1666 = vmatpush1.msra.mxu0 0.0
        %1667 = vmatprep.subr.mxu0 0.0
        %1668 = vmatpush1.msra.mxu0 0.0
        %1669 = vmatprep.subr.mxu0 0.0
        %1670 = vmatpush1.msra.mxu0 0.0
        %1671 = vmatprep.subr.mxu0 0.0
        %1672 = vmatpush1.msra.mxu0 0.0
        %1673 = vmatprep.subr.mxu0 0.0
        %1674 = vmatpush1.msra.mxu0 0.0
        %1675 = vmatprep.subr.mxu0 0.0
        %1676 = vmatpush1.msra.mxu0 0.0
        %1677 = vmatprep.subr.mxu0 0.0
        %1678 = vmatpush1.msra.mxu0 0.0
        %1679 = vmatprep.subr.mxu0 0.0
        %1680 = vmatpush1.msra.mxu0 0.0
        %1681 = vmatprep.subr.mxu0 0.0
        %1682 = vmatpush1.msra.mxu0 0.0
        %1683 = vmatprep.subr.mxu0 0.0
        %1684 = vmatpush1.msra.mxu0 0.0
        %1685 = vmatprep.subr.mxu0 0.0
        %1686 = vmatpush1.msra.mxu0 0.0
        %1687 = vmatprep.subr.mxu0 0.0
        %1688 = vmatpush1.msra.mxu0 0.0
        %1689 = vmatprep.subr.mxu0 0.0
        %1690 = vmatpush1.msra.mxu0 0.0
        %1691 = vmatprep.subr.mxu0 0.0
        %1692 = vmatpush1.msra.mxu0 0.0
        %1693 = vmatprep.subr.mxu0 0.0
        %1694 = vmatpush1.msra.mxu0 0.0
        %1695 = vmatprep.subr.mxu0 0.0
        %1696 = vmatpush1.msra.mxu0 0.0
        %1697 = vmatprep.subr.mxu0 0.0
        %1698 = vmatpush1.msra.mxu0 0.0
        %1699 = vmatprep.subr.mxu0 0.0
        %1700 = vmatpush1.msra.mxu0 0.0
        %1701 = vmatprep.subr.mxu0 0.0
        %1702 = vmatpush1.msra.mxu0 0.0
        %1703 = vmatprep.subr.mxu0 0.0
        %1704 = vmatpush1.msra.mxu0 0.0
        %1705 = vmatprep.subr.mxu0 0.0
        %1706 = vmatpush1.msra.mxu0 0.0
        %1707 = vmatprep.subr.mxu0 0.0
        %1708 = vmatpush1.msra.mxu0 0.0
        %1709 = vmatprep.subr.mxu0 0.0
        %1710 = vmatpush1.msra.mxu0 0.0
        %1711 = vmatprep.subr.mxu0 0.0
        %1712 = vmatpush1.msra.mxu0 0.0
        %1713 = vmatprep.subr.mxu0 0.0
        %1714 = vmatpush1.msra.mxu0 0.0
        %1715 = vmatprep.subr.mxu0 0.0
        %1716 = vmatpush1.msra.mxu0 0.0
        %1717 = vmatprep.subr.mxu0 0.0
        %1718 = vmatpush1.msra.mxu0 0.0
        %1719 = vmatprep.subr.mxu0 0.0
        %1720 = vmatpush1.msra.mxu0 0.0
        %1721 = vmatprep.mubr.f32.mxu0 0.0
        %v1722 = vand.u32 %v1501, 4294901760
        %v1723 = vsub.f32 %v1501, %v1722
        %1724 = vmatmul.mubr.f32.gmra.mrb[0].mxu0 %v1723
        %v1725 = vpop.f32.mrb[0].mxu0
        %v1726 = vadd.f32 %v1652, %v1725
        %v1727 = vpop.f32.mrb[0].mxu0
        %1728 = vdwg.mxu0
        %1729 = vmatprep.subr.mxu0 0.0
        %v1730 = vand.u32 %v1492, 4294901760
        %1731 = vmatpush1.msra.mxu0 %v1730
        %1732 = vmatprep.subr.mxu0 0.0
        %1733 = vmatpush1.msra.mxu0 0.0
        %1734 = vmatprep.subr.mxu0 0.0
        %1735 = vmatpush1.msra.mxu0 0.0
        %1736 = vmatprep.subr.mxu0 0.0
        %1737 = vmatpush1.msra.mxu0 0.0
        %1738 = vmatprep.subr.mxu0 0.0
        %1739 = vmatpush1.msra.mxu0 0.0
        %1740 = vmatprep.subr.mxu0 0.0
        %1741 = vmatpush1.msra.mxu0 0.0
        %1742 = vmatprep.subr.mxu0 0.0
        %1743 = vmatpush1.msra.mxu0 0.0
        %1744 = vmatprep.subr.mxu0 0.0
        %1745 = vmatpush1.msra.mxu0 0.0
        %1746 = vmatprep.subr.mxu0 0.0
        %1747 = vmatpush1.msra.mxu0 0.0
        %1748 = vmatprep.subr.mxu0 0.0
        %1749 = vmatpush1.msra.mxu0 0.0
        %1750 = vmatprep.subr.mxu0 0.0
        %1751 = vmatpush1.msra.mxu0 0.0
        %1752 = vmatprep.subr.mxu0 0.0
        %1753 = vmatpush1.msra.mxu0 0.0
        %1754 = vmatprep.subr.mxu0 0.0
        %1755 = vmatpush1.msra.mxu0 0.0
        %1756 = vmatprep.subr.mxu0 0.0
        %1757 = vmatpush1.msra.mxu0 0.0
        %1758 = vmatprep.subr.mxu0 0.0
        %1759 = vmatpush1.msra.mxu0 0.0
        %1760 = vmatprep.subr.mxu0 0.0
        %1761 = vmatpush1.msra.mxu0 0.0
        %1762 = vmatprep.subr.mxu0 0.0
        %1763 = vmatpush1.msra.mxu0 0.0
        %1764 = vmatprep.subr.mxu0 0.0
        %1765 = vmatpush1.msra.mxu0 0.0
        %1766 = vmatprep.subr.mxu0 0.0
        %1767 = vmatpush1.msra.mxu0 0.0
        %1768 = vmatprep.subr.mxu0 0.0
        %1769 = vmatpush1.msra.mxu0 0.0
        %1770 = vmatprep.subr.mxu0 0.0
        %1771 = vmatpush1.msra.mxu0 0.0
        %1772 = vmatprep.subr.mxu0 0.0
        %1773 = vmatpush1.msra.mxu0 0.0
        %1774 = vmatprep.subr.mxu0 0.0
        %1775 = vmatpush1.msra.mxu0 0.0
        %1776 = vmatprep.subr.mxu0 0.0
        %1777 = vmatpush1.msra.mxu0 0.0
        %1778 = vmatprep.subr.mxu0 0.0
        %1779 = vmatpush1.msra.mxu0 0.0
        %1780 = vmatprep.subr.mxu0 0.0
        %1781 = vmatpush1.msra.mxu0 0.0
        %1782 = vmatprep.subr.mxu0 0.0
        %1783 = vmatpush1.msra.mxu0 0.0
        %1784 = vmatprep.subr.mxu0 0.0
        %1785 = vmatpush1.msra.mxu0 0.0
        %1786 = vmatprep.subr.mxu0 0.0
        %1787 = vmatpush1.msra.mxu0 0.0
        %1788 = vmatprep.subr.mxu0 0.0
        %1789 = vmatpush1.msra.mxu0 0.0
        %1790 = vmatprep.subr.mxu0 0.0
        %1791 = vmatpush1.msra.mxu0 0.0
        %1792 = vmatprep.subr.mxu0 0.0
        %1793 = vmatpush1.msra.mxu0 0.0
        %1794 = vmatprep.mubr.f32.mxu0 0.0
        %v1795 = vand.u32 %v1501, 4294901760
        %v1796 = vsub.f32 %v1501, %v1795
        %v1797 = vand.u32 %v1796, 4294901760
        %1798 = vmatmul.mubr.f32.gmra.mrb[0].mxu0 %v1797
        %v1799 = vpop.f32.mrb[0].mxu0
        %v1800 = vadd.f32 %v1726, %v1799
        %v1801 = vpop.f32.mrb[0].mxu0
        %1802 = vdwg.mxu0
        %1803 = vmatprep.subr.mxu0 0.0
        %v1804 = vand.u32 %v1492, 4294901760
        %v1805 = vsub.f32 %v1492, %v1804
        %v1806 = vand.u32 %v1805, 4294901760
        %1807 = vmatpush1.msra.mxu0 %v1806
        %1808 = vmatprep.subr.mxu0 0.0
        %1809 = vmatpush1.msra.mxu0 0.0
        %1810 = vmatprep.subr.mxu0 0.0
        %1811 = vmatpush1.msra.mxu0 0.0
        %1812 = vmatprep.subr.mxu0 0.0
        %1813 = vmatpush1.msra.mxu0 0.0
        %1814 = vmatprep.subr.mxu0 0.0
        %1815 = vmatpush1.msra.mxu0 0.0
        %1816 = vmatprep.subr.mxu0 0.0
        %1817 = vmatpush1.msra.mxu0 0.0
        %1818 = vmatprep.subr.mxu0 0.0
        %1819 = vmatpush1.msra.mxu0 0.0
        %1820 = vmatprep.subr.mxu0 0.0
        %1821 = vmatpush1.msra.mxu0 0.0
        %1822 = vmatprep.subr.mxu0 0.0
        %1823 = vmatpush1.msra.mxu0 0.0
        %1824 = vmatprep.subr.mxu0 0.0
        %1825 = vmatpush1.msra.mxu0 0.0
        %1826 = vmatprep.subr.mxu0 0.0
        %1827 = vmatpush1.msra.mxu0 0.0
        %1828 = vmatprep.subr.mxu0 0.0
        %1829 = vmatpush1.msra.mxu0 0.0
        %1830 = vmatprep.subr.mxu0 0.0
        %1831 = vmatpush1.msra.mxu0 0.0
        %1832 = vmatprep.subr.mxu0 0.0
        %1833 = vmatpush1.msra.mxu0 0.0
        %1834 = vmatprep.subr.mxu0 0.0
        %1835 = vmatpush1.msra.mxu0 0.0
        %1836 = vmatprep.subr.mxu0 0.0
        %1837 = vmatpush1.msra.mxu0 0.0
        %1838 = vmatprep.subr.mxu0 0.0
        %1839 = vmatpush1.msra.mxu0 0.0
        %1840 = vmatprep.subr.mxu0 0.0
        %1841 = vmatpush1.msra.mxu0 0.0
        %1842 = vmatprep.subr.mxu0 0.0
        %1843 = vmatpush1.msra.mxu0 0.0
        %1844 = vmatprep.subr.mxu0 0.0
        %1845 = vmatpush1.msra.mxu0 0.0
        %1846 = vmatprep.subr.mxu0 0.0
        %1847 = vmatpush1.msra.mxu0 0.0
        %1848 = vmatprep.subr.mxu0 0.0
        %1849 = vmatpush1.msra.mxu0 0.0
        %1850 = vmatprep.subr.mxu0 0.0
        %1851 = vmatpush1.msra.mxu0 0.0
        %1852 = vmatprep.subr.mxu0 0.0
        %1853 = vmatpush1.msra.mxu0 0.0
        %1854 = vmatprep.subr.mxu0 0.0
        %1855 = vmatpush1.msra.mxu0 0.0
        %1856 = vmatprep.subr.mxu0 0.0
        %1857 = vmatpush1.msra.mxu0 0.0
        %1858 = vmatprep.subr.mxu0 0.0
        %1859 = vmatpush1.msra.mxu0 0.0
        %1860 = vmatprep.subr.mxu0 0.0
        %1861 = vmatpush1.msra.mxu0 0.0
        %1862 = vmatprep.subr.mxu0 0.0
        %1863 = vmatpush1.msra.mxu0 0.0
        %1864 = vmatprep.subr.mxu0 0.0
        %1865 = vmatpush1.msra.mxu0 0.0
        %1866 = vmatprep.subr.mxu0 0.0
        %1867 = vmatpush1.msra.mxu0 0.0
        %1868 = vmatprep.subr.mxu0 0.0
        %1869 = vmatpush1.msra.mxu0 0.0
        %1870 = vmatprep.mubr.f32.mxu0 0.0
        %v1871 = vand.u32 %v1501, 4294901760
        %1872 = vmatmul.mubr.f32.gmra.mrb[0].mxu0 %v1871
        %v1873 = vpop.f32.mrb[0].mxu0
        %v1874 = vadd.f32 %v1800, %v1873
        %v1875 = vpop.f32.mrb[0].mxu0
        %1876 = vdwg.mxu0
        %1877 = vmatprep.subr.mxu0 0.0
        %v1878 = vand.u32 %v1492, 4294901760
        %1879 = vmatpush1.msra.mxu0 %v1878
        %1880 = vmatprep.subr.mxu0 0.0
        %1881 = vmatpush1.msra.mxu0 0.0
        %1882 = vmatprep.subr.mxu0 0.0
        %1883 = vmatpush1.msra.mxu0 0.0
        %1884 = vmatprep.subr.mxu0 0.0
        %1885 = vmatpush1.msra.mxu0 0.0
        %1886 = vmatprep.subr.mxu0 0.0
        %1887 = vmatpush1.msra.mxu0 0.0
        %1888 = vmatprep.subr.mxu0 0.0
        %1889 = vmatpush1.msra.mxu0 0.0
        %1890 = vmatprep.subr.mxu0 0.0
        %1891 = vmatpush1.msra.mxu0 0.0
        %1892 = vmatprep.subr.mxu0 0.0
        %1893 = vmatpush1.msra.mxu0 0.0
        %1894 = vmatprep.subr.mxu0 0.0
        %1895 = vmatpush1.msra.mxu0 0.0
        %1896 = vmatprep.subr.mxu0 0.0
        %1897 = vmatpush1.msra.mxu0 0.0
        %1898 = vmatprep.subr.mxu0 0.0
        %1899 = vmatpush1.msra.mxu0 0.0
        %1900 = vmatprep.subr.mxu0 0.0
        %1901 = vmatpush1.msra.mxu0 0.0
        %1902 = vmatprep.subr.mxu0 0.0
        %1903 = vmatpush1.msra.mxu0 0.0
        %1904 = vmatprep.subr.mxu0 0.0
        %1905 = vmatpush1.msra.mxu0 0.0
        %1906 = vmatprep.subr.mxu0 0.0
        %1907 = vmatpush1.msra.mxu0 0.0
        %1908 = vmatprep.subr.mxu0 0.0
        %1909 = vmatpush1.msra.mxu0 0.0
        %1910 = vmatprep.subr.mxu0 0.0
        %1911 = vmatpush1.msra.mxu0 0.0
        %1912 = vmatprep.subr.mxu0 0.0
        %1913 = vmatpush1.msra.mxu0 0.0
        %1914 = vmatprep.subr.mxu0 0.0
        %1915 = vmatpush1.msra.mxu0 0.0
        %1916 = vmatprep.subr.mxu0 0.0
        %1917 = vmatpush1.msra.mxu0 0.0
        %1918 = vmatprep.subr.mxu0 0.0
        %1919 = vmatpush1.msra.mxu0 0.0
        %1920 = vmatprep.subr.mxu0 0.0
        %1921 = vmatpush1.msra.mxu0 0.0
        %1922 = vmatprep.subr.mxu0 0.0
        %1923 = vmatpush1.msra.mxu0 0.0
        %1924 = vmatprep.subr.mxu0 0.0
        %1925 = vmatpush1.msra.mxu0 0.0
        %1926 = vmatprep.subr.mxu0 0.0
        %1927 = vmatpush1.msra.mxu0 0.0
        %1928 = vmatprep.subr.mxu0 0.0
        %1929 = vmatpush1.msra.mxu0 0.0
        %1930 = vmatprep.subr.mxu0 0.0
        %1931 = vmatpush1.msra.mxu0 0.0
        %1932 = vmatprep.subr.mxu0 0.0
        %1933 = vmatpush1.msra.mxu0 0.0
        %1934 = vmatprep.subr.mxu0 0.0
        %1935 = vmatpush1.msra.mxu0 0.0
        %1936 = vmatprep.subr.mxu0 0.0
        %1937 = vmatpush1.msra.mxu0 0.0
        %1938 = vmatprep.subr.mxu0 0.0
        %1939 = vmatpush1.msra.mxu0 0.0
        %1940 = vmatprep.subr.mxu0 0.0
        %1941 = vmatpush1.msra.mxu0 0.0
        %1942 = vmatprep.mubr.f32.mxu0 0.0
        %v1943 = vand.u32 %v1501, 4294901760
        %1944 = vmatmul.mubr.f32.gmra.mrb[0].mxu0 %v1943
        %v1945 = vpop.f32.mrb[0].mxu0
        %v1946 = vadd.f32 %v1874, %v1945
        %v1947 = vpop.f32.mrb[0].mxu0
        %1948 = vdwg.mxu0
        %v1949 = vmul.f32 %v1946, %v479
        %s1950 = sld [smem:[#allocation10]]
        %v1951 = vstv %s1950
        %v1952 = vmul.f32 %v519, %v1951
        %s1953 = sld [smem:[#allocation10 + $0x3]]
        %v1954 = vstv %s1953
        %v1955 = vadd.f32 %v1952, %v1954
        %v1956 = vmax.f32 %v1955, 0.0
        %s1957 = sld [smem:[#allocation10 + $0x1]]
        %v1958 = vstv %s1957
        %v1959 = vmul.f32 %v519, %v1958
        %s1960 = sld [smem:[#allocation10 + $0x4]]
        %v1961 = vstv %s1960
        %v1962 = vadd.f32 %v1959, %v1961
        %v1963 = vmax.f32 %v1962, 0.0
        %s1964 = sld [smem:[#allocation10 + $0x2]]
        %v1965 = vstv %s1964
        %v1966 = vmul.f32 %v519, %v1965
        %s1967 = sld [smem:[#allocation10 + $0x5]]
        %v1968 = vstv %s1967
        %v1969 = vadd.f32 %v1966, %v1968
        %v1970 = vmax.f32 %v1969, 0.0
        %s1971 = sld [smem:[#allocation10 + $0x6]]
        %v1972 = vstv %s1971
        %v1973 = vmul.f32 %v1956, %v1972
        %s1974 = sld [smem:[#allocation10 + $0x7]]
        %v1975 = vstv %s1974
        %v1976 = vmul.f32 %v1963, %v1975
        %v1977 = vadd.f32 %v1973, %v1976
        %s1978 = sld [smem:[#allocation10 + $0x8]]
        %v1979 = vstv %s1978
        %v1980 = vmul.f32 %v1970, %v1979
        %v1981 = vadd.f32 %v1977, %v1980
        %s1982 = sld [smem:[#allocation10 + $0xf]]
        %v1983 = vstv %s1982
        %v1984 = vadd.f32 %v1981, %v1983
        %v1985 = vmax.f32 %v1984, 0.0
        %s1986 = sld [smem:[#allocation10 + $0x9]]
        %v1987 = vstv %s1986
        %v1988 = vmul.f32 %v1956, %v1987
        %s1989 = sld [smem:[#allocation10 + $0xa]]
        %v1990 = vstv %s1989
        %v1991 = vmul.f32 %v1963, %v1990
        %v1992 = vadd.f32 %v1988, %v1991
        %s1993 = sld [smem:[#allocation10 + $0xb]]
        %v1994 = vstv %s1993
        %v1995 = vmul.f32 %v1970, %v1994
        %v1996 = vadd.f32 %v1992, %v1995
        %s1997 = sld [smem:[#allocation10 + $0x10]]
        %v1998 = vstv %s1997
        %v1999 = vadd.f32 %v1996, %v1998
        %v2000 = vmax.f32 %v1999, 0.0
        %s2001 = sld [smem:[#allocation10 + $0xc]]
        %v2002 = vstv %s2001
        %v2003 = vmul.f32 %v1956, %v2002
        %s2004 = sld [smem:[#allocation10 + $0xd]]
        %v2005 = vstv %s2004
        %v2006 = vmul.f32 %v1963, %v2005
        %v2007 = vadd.f32 %v2003, %v2006
        %s2008 = sld [smem:[#allocation10 + $0xe]]
        %v2009 = vstv %s2008
        %v2010 = vmul.f32 %v1970, %v2009
        %v2011 = vadd.f32 %v2007, %v2010
        %s2012 = sld [smem:[#allocation10 + $0x11]]
        %v2013 = vstv %s2012
        %v2014 = vadd.f32 %v2011, %v2013
        %v2015 = vmax.f32 %v2014, 0.0
        %s2016 = sld [smem:[#allocation10 + $0x12]]
        %v2017 = vstv %s2016
        %v2018 = vmul.f32 %v1985, %v2017
        %s2019 = sld [smem:[#allocation10 + $0x13]]
        %v2020 = vstv %s2019
        %v2021 = vmul.f32 %v2000, %v2020
        %v2022 = vadd.f32 %v2018, %v2021
        %s2023 = sld [smem:[#allocation10 + $0x14]]
        %v2024 = vstv %s2023
        %v2025 = vmul.f32 %v2015, %v2024
        %v2026 = vadd.f32 %v2022, %v2025
        %s2027 = sld [smem:[#allocation10 + $0x15]]
        %v2028 = vstv %s2027
        %v2029 = vadd.f32 %v2026, %v2028
        %v2030 = vmul.f32 %v2029, 1.442695
        %v2031 = vpow.pop %v2030
        %v2032 = vmul.f32 %v480, %v479
        %v2033 = vrcp.pop %v557
        %v2034 = vmul.f32 1.0, %v2033
        %2036 = vset.pattern.permute.xlu0 0
        %2037 = vperm.xlu0 %2036, %v558
        %v2038 = vpop.permute.xlu0 %2037
        %2041 = vset.pattern.permute.xlu0 0
        %2042 = vperm.xlu0 %2041, %v559
        %v2043 = vpop.permute.xlu0 %2042
        %v2045 = vlaneseq
        %v2046 = vshrl.u32 %v2045, 7
        %v2047 = vsub.s32 %v469, %v2046
        %v2048 = vrot.slane %v2038, %v2047
        %v2049 = vlaneseq
        %v2050 = vshrl.u32 %v2049, 7
        %v2051 = vsub.s32 %v469, %v2050
        %v2052 = vrot.slane %v2043, %v2051
        %vm2053 = vcmask 1042434
        %v2054 = vsel %vm2053, %v2048, %v2048
        %vm2055 = vcmask 1043459
        %v2056 = vsel %vm2055, %v2048, %v2054
        %vm2057 = vcmask 1044484
        %v2058 = vsel %vm2057, %v2048, %v2056
        %vm2059 = vcmask 1045509
        %v2060 = vsel %vm2059, %v2048, %v2058
        %vm2061 = vcmask 1046534
        %v2062 = vsel %vm2061, %v2048, %v2060
        %vm2063 = vcmask 1047559
        %v2064 = vsel %vm2063, %v2048, %v2062
        %v2065 = vsel %vm2053, %v2052, %v2052
        %v2066 = vsel %vm2055, %v2052, %v2065
        %v2067 = vsel %vm2057, %v2052, %v2066
        %v2068 = vsel %vm2059, %v2052, %v2067
        %v2069 = vsel %vm2061, %v2052, %v2068
        %v2070 = vsel %vm2063, %v2052, %v2069
        %v2073 = vmul.f32 %v2038, %v2064
        %v2074 = vmul.f32 %v2043, %v2070
        %v2075 = vmul.f32 %v466, %v2032
        %v2076 = vmul.f32 %v467, %v2032
        %v2078 = vlaneseq
        %v2079 = vshrl.u32 %v2078, 7
        %v2080 = vsub.s32 0, %v2079
        %v2081 = vrot.slane %v2034, %v2080
        %v2082 = vlaneseq
        %v2083 = vshrl.u32 %v2082, 7
        %v2084 = vsub.s32 1, %v2083
        %v2085 = vrot.slane %v2034, %v2084
        %v2088 = vmul.f32 %v2073, %v2081
        %v2089 = vmul.f32 %v2074, %v2085
        %v2090 = vsub.f32 %v2075, %v2088
        %v2091 = vsub.f32 %v2076, %v2089
        %v2094 = vunpack.c.l.s4 1966171168
        %v2095 = vunpack.c.0.s8 %v2094
        %v2096 = vlaneseq
        %v2097 = vshrl.u32 %v2096, 7
        %v2098 = vsub.s32 %v2095, %v2097
        %v2099 = vrot.slane %v1949, %v2098
        %v2100 = vcombine.high %v2099, %v2099
        %v2102 = vunpack.c.l.s4 1966171168
        %v2103 = vunpack.c.0.s8 %v2102
        %v2104 = vlaneseq
        %v2105 = vshrl.u32 %v2104, 7
        %v2106 = vsub.s32 %v2103, %v2105
        %v2107 = vrot.slane %v2099, %v2106
        %v2109 = vunpack.c.l.s4 1966171168
        %v2110 = vunpack.c.0.s8 %v2109
        %v2111 = vlaneseq
        %v2112 = vshrl.u32 %v2111, 7
        %v2113 = vsub.s32 %v2110, %v2112
        %v2114 = vrot.slane %v2100, %v2113
        %v2115 = vlaneseq
        %v2116 = vshrl.u32 %v2115, 7
        %v2117 = vsub.s32 0, %v2116
        %v2118 = vrot.slane %v2107, %v2117
        %v2119 = vlaneseq
        %v2120 = vshrl.u32 %v2119, 7
        %v2121 = vsub.s32 0, %v2120
        %v2122 = vrot.slane %v2114, %v2121
        %v2125 = vmul.f32 %v2090, %v2118
        %v2126 = vmul.f32 %v2091, %v2122
        %v2127 = vsel %vm483, %v2125, 0.0
        %2128 = vadd.xlane.f32.xlu0 %v2127
        %v2129 = vpop.xlane.xlu0 %2128
        %v2130 = vsel %vm483, %v2126, 0.0
        %2131 = vadd.xlane.f32.xlu0 %v2130
        %v2132 = vpop.xlane.xlu0 %2131
        %v2133 = vlaneseq
        %v2134 = vshrl.u32 %v2133, 7
        %v2135 = vsub.s32 0, %v2134
        %v2136 = vrot.slane %v1949, %v2135
        %2138 = vbcast.lane.b32.xlu0 %v2136, 256
        %v2139 = vpop.permute.xlu0 %2138
        %v2140 = vlaneseq
        %v2141 = vshrl.u32 %v2140, 7
        %v2142 = vsub.s32 1, %v2141
        %v2143 = vrot.slane %v1949, %v2142
        %2145 = vbcast.lane.b32.xlu0 %v2143, 256
        %v2146 = vpop.permute.xlu0 %2145
        %v2149 = vmul.f32 %v2129, %v2139
        %v2150 = vmul.f32 %v2132, %v2146
        %2153 = vset.pattern.permute.xlu0 0
        %2154 = vperm.xlu0 %2153, %v2149
        %v2155 = vpop.permute.xlu0 %2154
        %2156 = vset.pattern.permute.xlu0 0
        %2157 = vperm.xlu0 %2156, %v2150
        %v2158 = vpop.permute.xlu0 %2157
        %v2159 = vlaneseq
        %v2160 = vshrl.u32 %v2159, 7
        %v2161 = vsub.s32 %v469, %v2160
        %v2162 = vrot.slane %v2155, %v2161
        %v2163 = vlaneseq
        %v2164 = vshrl.u32 %v2163, 7
        %v2165 = vsub.s32 %v469, %v2164
        %v2166 = vrot.slane %v2158, %v2165
        %v2167 = vsel %vm513, %v2166, %v2162
        %v2169 = vsel %vm516, %v2167, 0.0
        %2170 = vadd.xlane.f32.xlu0 %v2169
        %v2171 = vpop.xlane.xlu0 %2170
        %v2172 = vadd.f32 %v2031, %v2171
        %v2173 = vsub.f32 %v2172, %v2171
        %v2174 = vrcp.pop %v2173
        %v2175 = vmul.f32 1.0, %v2174
        %v2176 = vsub.f32 0.0, %v2175
        %v2179 = vlaneseq
        %v2180 = vshrl.u32 %v2179, 7
        %v2181 = vsub.s32 %v469, %v2180
        %v2182 = vrot.slane %v2129, %v2181
        %v2183 = vlaneseq
        %v2184 = vshrl.u32 %v2183, 7
        %v2185 = vsub.s32 %v469, %v2184
        %v2186 = vrot.slane %v2132, %v2185
        %v2187 = vsel %vm513, %v2186, %v2182
        %v2189 = vmul.f32 %v2176, %v2187
        %v2191 = vsub.f32 %v1949, %v584
        %v2192 = vsub.f32 %v2172, %v519
        %v2193 = vlaneseq
        %v2194 = vshrl.u32 %v2193, 7
        %v2195 = vsub.s32 0, %v2194
        %v2196 = vrot.slane %v2191, %v2195
        %2198 = vbcast.lane.b32.xlu0 %v2196, 256
        %v2199 = vpop.permute.xlu0 %2198
        %v2200 = vlaneseq
        %v2201 = vshrl.u32 %v2200, 7
        %v2202 = vsub.s32 1, %v2201
        %v2203 = vrot.slane %v2191, %v2202
        %2205 = vbcast.lane.b32.xlu0 %v2203, 256
        %v2206 = vpop.permute.xlu0 %2205
        %v2207 = vmul.f32 %v2199, %v473
        %v2208 = vmul.f32 %v2206, %v473
        %v2209 = vadd.f32 %v464, %v2207
        %v2210 = vadd.f32 %v465, %v2208
        %v2213 = vunpack.c.l.s4 1966171168
        %v2214 = vunpack.c.0.s8 %v2213
        %v2215 = vlaneseq
        %v2216 = vshrl.u32 %v2215, 7
        %v2217 = vsub.s32 %v2214, %v2216
        %v2218 = vrot.slane %v2191, %v2217
        %v2219 = vcombine.high %v2218, %v2218
        %v2221 = vunpack.c.l.s4 1966171168
        %v2222 = vunpack.c.0.s8 %v2221
        %v2223 = vlaneseq
        %v2224 = vshrl.u32 %v2223, 7
        %v2225 = vsub.s32 %v2222, %v2224
        %v2226 = vrot.slane %v2218, %v2225
        %v2228 = vunpack.c.l.s4 1966171168
        %v2229 = vunpack.c.0.s8 %v2228
        %v2230 = vlaneseq
        %v2231 = vshrl.u32 %v2230, 7
        %v2232 = vsub.s32 %v2229, %v2231
        %v2233 = vrot.slane %v2219, %v2232
        %v2234 = vlaneseq
        %v2235 = vshrl.u32 %v2234, 7
        %v2236 = vsub.s32 0, %v2235
        %v2237 = vrot.slane %v2226, %v2236
        %v2238 = vlaneseq
        %v2239 = vshrl.u32 %v2238, 7
        %v2240 = vsub.s32 0, %v2239
        %v2241 = vrot.slane %v2233, %v2240
        %v2244 = vmul.f32 %v2237, %v478
        %v2245 = vmul.f32 %v2241, %v478
        %v2246 = vadd.f32 %v2209, %v2244
        %v2247 = vadd.f32 %v2210, %v2245
        %v2249 = vlaneseq
        %v2250 = vshrl.u32 %v2249, 7
        %v2251 = vsub.s32 0, %v2250
        %v2252 = vrot.slane %v2192, %v2251
        %v2253 = vlaneseq
        %v2254 = vshrl.u32 %v2253, 7
        %v2255 = vsub.s32 1, %v2254
        %v2256 = vrot.slane %v2192, %v2255
        %v2259 = vmul.f32 %v478, %v473
        %v2260 = vmul.f32 %v2252, %v2259
        %v2261 = vmul.f32 %v2256, %v2259
        %v2262 = vadd.f32 %v2246, %v2260
        %v2263 = vadd.f32 %v2247, %v2261
        %2264 = vst.msk [vmem:[#allocation11] sm:$0xff] %vm483, %v2262
        %2265 = vst.msk [vmem:[#allocation11 + $0x8] sm:$0xff] %vm483, %v2263
        %v2266 = vlaneseq
        %v2267 = vshrl.u32 %v2266, 7
        %v2268 = vsub.s32 0, %v2267
        %v2269 = vrot.slane %v2189, %v2268
        %2271 = vbcast.lane.b32.xlu0 %v2269, 256
        %v2272 = vpop.permute.xlu0 %2271
        %v2273 = vlaneseq
        %v2274 = vshrl.u32 %v2273, 7
        %v2275 = vsub.s32 1, %v2274
        %v2276 = vrot.slane %v2189, %v2275
        %2278 = vbcast.lane.b32.xlu0 %v2276, 256
        %v2279 = vpop.permute.xlu0 %2278
        %v2282 = vunpack.c.l.s4 1966171168
        %v2283 = vunpack.c.0.s8 %v2282
        %v2284 = vlaneseq
        %v2285 = vshrl.u32 %v2284, 7
        %v2286 = vsub.s32 %v2283, %v2285
        %v2287 = vrot.slane %v2189, %v2286
        %v2288 = vcombine.high %v2287, %v2287
        %v2290 = vunpack.c.l.s4 1966171168
        %v2291 = vunpack.c.0.s8 %v2290
        %v2292 = vlaneseq
        %v2293 = vshrl.u32 %v2292, 7
        %v2294 = vsub.s32 %v2291, %v2293
        %v2295 = vrot.slane %v2287, %v2294
        %v2297 = vunpack.c.l.s4 1966171168
        %v2298 = vunpack.c.0.s8 %v2297
        %v2299 = vlaneseq
        %v2300 = vshrl.u32 %v2299, 7
        %v2301 = vsub.s32 %v2298, %v2300
        %v2302 = vrot.slane %v2288, %v2301
        %v2303 = vlaneseq
        %v2304 = vshrl.u32 %v2303, 7
        %v2305 = vsub.s32 0, %v2304
        %v2306 = vrot.slane %v2295, %v2305
        %v2307 = vlaneseq
        %v2308 = vshrl.u32 %v2307, 7
        %v2309 = vsub.s32 0, %v2308
        %v2310 = vrot.slane %v2302, %v2309
        %v2313 = vmul.f32 %v2272, %v2306
        %v2314 = vmul.f32 %v2279, %v2310
        %v2315 = vrcp.pop %v2175
        %v2316 = vmul.f32 1.0, %v2315
        %v2318 = vlaneseq
        %v2319 = vshrl.u32 %v2318, 7
        %v2320 = vsub.s32 0, %v2319
        %v2321 = vrot.slane %v2316, %v2320
        %v2322 = vlaneseq
        %v2323 = vshrl.u32 %v2322, 7
        %v2324 = vsub.s32 1, %v2323
        %v2325 = vrot.slane %v2316, %v2324
        %v2328 = vmul.f32 %v2313, %v2321
        %v2329 = vmul.f32 %v2314, %v2325
        %v2330 = vadd.f32 %v2090, %v2328
        %v2331 = vadd.f32 %v2091, %v2329
        %v2332 = vmul.f32 %v2272, %v473
        %v2333 = vmul.f32 %v2279, %v473
        %v2334 = vadd.f32 %v2330, %v2332
        %v2335 = vadd.f32 %v2331, %v2333
        %v2336 = vmul.f32 %v2306, %v478
        %v2337 = vmul.f32 %v2310, %v478
        %v2338 = vadd.f32 %v2334, %v2336
        %v2339 = vadd.f32 %v2335, %v2337
        %v2341 = vlaneseq
        %v2342 = vshrl.u32 %v2341, 7
        %v2343 = vsub.s32 0, %v2342
        %v2344 = vrot.slane %v2175, %v2343
        %v2345 = vlaneseq
        %v2346 = vshrl.u32 %v2345, 7
        %v2347 = vsub.s32 1, %v2346
        %v2348 = vrot.slane %v2175, %v2347
        %v2351 = vmul.f32 %v2344, %v2259
        %v2352 = vmul.f32 %v2348, %v2259
        %v2353 = vadd.f32 %v2338, %v2351
        %v2354 = vadd.f32 %v2339, %v2352
        %2355 = vst.msk [vmem:[#allocation12] sm:$0xff] %vm483, %v2353
        %2356 = vst.msk [vmem:[#allocation12 + $0x8] sm:$0xff] %vm483, %v2354
        // Predicated region
        $region81: #{tpu_custom_call.1} parent=55 // pred_check
          %p2357 = pneg %p244
        $region82: #{tpu_custom_call.1} parent=55 // pred_check_branch
          %2359 = sbr.rel (%p2357) target = $region84
        $region83: #{tpu_custom_call.1} parent=55 // pred_region
          %s2361 = ssub.s32 256, 256
          %2362 = vsyncadd [#allocation4], %s2361
          %s2363 = sshll.u32 [#allocation11], 4
          %s2364 = int_to_ptr.vmem [resolvable:$true] %s2363
          %2369 = dma.vmem_to_hbm [thread:$0]  %s2364, 256, %s9, [#allocation4], 128, 128, 8
        $region84: #{tpu_custom_call.1} parent=55 // pred_fallthru
          _
        // Predicated region
        $region85: #{tpu_custom_call.1} parent=55 // pred_check
          %p2370 = pneg %p265
        $region86: #{tpu_custom_call.1} parent=55 // pred_check_branch
          %2372 = sbr.rel (%p2370) target = $region88
        $region87: #{tpu_custom_call.1} parent=55 // pred_region
          %s2374 = ssub.s32 256, 256
          %2375 = vsyncadd [#allocation13], %s2374
          %s2376 = sshll.u32 [#allocation12], 4
          %s2377 = int_to_ptr.vmem [resolvable:$true] %s2376
          %2382 = dma.vmem_to_hbm [thread:$0]  %s2377, 256, %s10, [#allocation13], 128, 128, 8
        $region88: #{tpu_custom_call.1} parent=55 // pred_fallthru
          _
        // Predicated region
        $region89: #{tpu_custom_call.1} parent=55 // pred_check
          %p2383 = pneg %p244
        $region90: #{tpu_custom_call.1} parent=55 // pred_check_branch
          %2385 = sbr.rel (%p2383) target = $region92
        $region91: #{tpu_custom_call.1} parent=55 // pred_region
          %2386 = dma.done [#allocation4], 256
        $region92: #{tpu_custom_call.1} parent=55 // pred_fallthru
          _
        // Predicated region
        $region93: #{tpu_custom_call.1} parent=55 // pred_check
          %p2387 = pneg %p265
        $region94: #{tpu_custom_call.1} parent=55 // pred_check_branch
          %2389 = sbr.rel (%p2387) target = $region96
        $region95: #{tpu_custom_call.1} parent=55 // pred_region
          %2390 = dma.done [#allocation13], 256
        $region96: #{tpu_custom_call.1} parent=55 // pred_fallthru
          _
      $region56: #{tpu_custom_call.1} parent=5 // pred_fallthru
        _
      %p2391 = scmp.le.s32.totalorder 2, %s22
      // Predicated region
      $region97: #{tpu_custom_call.1} parent=5 // pred_check
        %p2392 = pneg %p2391
      $region98: #{tpu_custom_call.1} parent=5 // pred_check_branch
        %2394 = sbr.rel (%p2392) target = $region100
      $region99: #{tpu_custom_call.1} parent=5 // pred_region
        %s2395 = ssub.s32 %s22, 2
      $region100: #{tpu_custom_call.1} parent=5 // pred_fallthru
        _
    $region6: #{tpu_custom_call.1} parent=1 // loop_footer
      %s26 = sadd.s32 1, %s22
    $region7: #{tpu_custom_call.1} parent=1 // loop_footer_branch
      %21 = sbr.rel target = $region3
    $region8: #{tpu_custom_call.1} parent=1 // loop_exit
      _
    %2396 = vsyncpa [#allocation3], 1
    %s2397 = scalar_lea.sflag [#allocation3], 1
    %2398 = vsyncpa %s2397, 1
    %2399 = vsyncpa [#allocation7], 1
    %2400 = vsyncpa [#allocation4], 1
    %s2401 = scalar_lea.sflag [#allocation4], 1
    %2402 = vsyncpa %s2401, 1
    %2403 = vsyncpa [#allocation13], 1
    %2404 = vsyncpa [#allocation5], 1
    %s2405 = scalar_lea.sflag [#allocation5], 1
    %2406 = vsyncpa %s2405, 1

</llo_original>
